<compile_context>
chip_gen: v7x
topology: tpu7x:2x2x1
jax: 0.10.0
libtpu: 0.0.40
codegen_flags: <defaults>
</compile_context>

<pallas_src>
import jax
import jax.numpy as jnp
from jax import lax
from jax.experimental import pallas as pl
from jax.experimental.pallas import tpu as pltpu

EMBED_DIM = 768
IN_CHANNELS = 3
PATCH_SIZE = 16


def _round_up(x, m):
    return ((x + m - 1) // m) * m


# ----------------------------- Pallas kernel -------------------------------
def patch_embed_kernel(p_ref, w_ref, b_ref, o_ref):
    """One grid step: O_tile = bf16(P_tile @ W + bias); full K and N resident."""
    acc = jnp.dot(p_ref[...], w_ref[...], preferred_element_type=jnp.float32)
    o_ref[...] = (acc + b_ref[...]).astype(o_ref.dtype)


def patch_embed_matmul(patches, weight, bias, *, tm=1024, out_dtype=jnp.bfloat16):
    """patches: (M, K) bf16, weight: (K, N) bf16, bias: (1, N) f32 -> (M, N) out_dtype."""
    M, K = patches.shape
    K2, N = weight.shape
    assert K == K2
    assert K % 128 == 0 and N % 128 == 0

    # Row tile: multiple of 8, capped at ~ceil(M/2) so the (megacore-parallel)
    # row axis yields >= 2 grid steps whenever M allows it.  No padding of M:
    # ragged last tile handled by the cdiv grid (stores past M are clipped).
    tm = max(8, min(tm, _round_up(pl.cdiv(M, 2), 8)))
    grid = (pl.cdiv(M, tm),)

    flops = 2 * M * K * N
    bytes_accessed = (
        M * K * patches.dtype.itemsize              # patch-matrix read (bf16)
        + K * N * weight.dtype.itemsize             # weight read once (bf16)
        + N * bias.dtype.itemsize                   # bias read once (f32)
        + M * N * jnp.dtype(out_dtype).itemsize     # output write (bf16)
    )

    return pl.pallas_call(
        patch_embed_kernel,
        out_shape=jax.ShapeDtypeStruct((M, N), out_dtype),
        grid_spec=pltpu.PrefetchScalarGridSpec(
            num_scalar_prefetch=0,
            grid=grid,
            in_specs=[
                pl.BlockSpec((tm, K), lambda i: (i, 0)),   # streamed patch rows
                pl.BlockSpec((K, N), lambda i: (0, 0)),    # weight, resident
                pl.BlockSpec((1, N), lambda i: (0, 0)),    # bias, resident
            ],
            out_specs=pl.BlockSpec((tm, N), lambda i: (i, 0)),
        ),
        compiler_params=pltpu.CompilerParams(
            dimension_semantics=("parallel",),
            # Best effort: let XLA fuse the im2col producer into the patches
            # operand instead of round-tripping it through HBM.
            allow_input_fusion=[True, False, False],
        ),
        cost_estimate=pl.CostEstimate(
            flops=flops, transcendentals=0, bytes_accessed=bytes_accessed
        ),
    )(patches, weight, bias)


# ------------------------------ Module wrapper ------------------------------
def patcher_conv_forward(x, conv_w, conv_b, *,
                         compute_dtype=jnp.bfloat16, out_dtype=jnp.bfloat16):
    """Forward pass equivalent to PatcherConv.forward (conv -> flatten -> permute).

    x:      (B, C, H, W)  float32   (NCHW, like PyTorch)
    conv_w: (EMBED_DIM, C, P, P)    float32  (PyTorch Conv2d weight layout)
    conv_b: (EMBED_DIM,)            float32
    returns (B, (H//P)*(W//P), EMBED_DIM) in out_dtype (bf16 by default)
    """
    B, C, H, W = x.shape
    P = PATCH_SIZE
    assert C == IN_CHANNELS and H % P == 0 and W % P == 0
    nph, npw = H // P, W // P

    # im2col with (c, kh, kw) ordering == Conv2d's contraction order for
    # stride == kernel_size.  Emitted directly in bf16 so a materialized
    # transpose moves half the bytes of an f32 patch matrix.
    patches = x.reshape(B, C, nph, P, npw, P)
    patches = patches.transpose(0, 2, 4, 1, 3, 5)            # (B, nph, npw, C, P, P)
    patches = patches.reshape(B * nph * npw, C * P * P)       # (M, K)
    patches = patches.astype(compute_dtype)

    # Conv weight (O, C, P, P) -> (K, O) so that out = patches @ W + b.
    w_mat = conv_w.reshape(EMBED_DIM, C * P * P).T.astype(compute_dtype)  # (K, N)
    b_mat = conv_b.reshape(1, EMBED_DIM).astype(jnp.float32)              # (1, N)

    out = patch_embed_matmul(patches, w_mat, b_mat, out_dtype=out_dtype)  # (M, N)
    return out.reshape(B, nph * npw, EMBED_DIM)


# ---------------------------------- Main ------------------------------------
if __name__ == "__main__":
    key = jax.random.PRNGKey(0)
    k_x, k_w, k_b = jax.random.split(key, 3)

    # Small-but-consistent shapes: B=2, C=3, H=W=32 -> 4 patches of 16x16 each.
    B, H, W = 2, 32, 32
    x = jax.random.normal(k_x, (B, IN_CHANNELS, H, W), dtype=jnp.float32)

    fan_in = IN_CHANNELS * PATCH_SIZE * PATCH_SIZE
    conv_w = jax.random.normal(
        k_w, (EMBED_DIM, IN_CHANNELS, PATCH_SIZE, PATCH_SIZE), dtype=jnp.float32
    ) * (1.0 / jnp.sqrt(fan_in))
    conv_b = jax.random.normal(k_b, (EMBED_DIM,), dtype=jnp.float32) * 0.02

    fwd = jax.jit(patcher_conv_forward)
    out = jax.block_until_ready(fwd(x, conv_w, conv_b))

    # Reference: lax conv on bf16-rounded inputs (same quantization as the
    # kernel's bf16 MXU operands, f32 accumulation).  Kernel output is bf16,
    # so compare in f32 with tolerance covering one extra bf16 rounding.
    x_q = x.astype(jnp.bfloat16).astype(jnp.float32)
    w_q = conv_w.astype(jnp.bfloat16).astype(jnp.float32)
    ref = lax.conv_general_dilated(
        x_q, w_q, window_strides=(PATCH_SIZE, PATCH_SIZE), padding="VALID",
        dimension_numbers=("NCHW", "OIHW", "NCHW"),
    ) + conv_b[None, :, None, None]
    ref = ref.reshape(B, EMBED_DIM, -1).transpose(0, 2, 1)

    n_patches = (H // PATCH_SIZE) * (W // PATCH_SIZE)
    assert out.shape == (B, n_patches, EMBED_DIM)
    assert out.dtype == jnp.bfloat16
    assert jnp.allclose(out.astype(jnp.float32), ref, atol=5e-2, rtol=5e-2)

    print("KERNEL_OK")
</pallas_src>

<mosaic_0001>
module attributes {stable_mosaic.version = 11 : i64} {
  func.func @patch_embed_kernel(%arg0: i32, %arg1: memref<8x768xbf16, #tpu.memory_space<vmem>>, %arg2: memref<768x768xbf16, #tpu.memory_space<vmem>>, %arg3: memref<1x768xf32, #tpu.memory_space<vmem>>, %arg4: memref<8x768xbf16, #tpu.memory_space<vmem>>) attributes {dimension_semantics = [#tpu.dimension_semantics<parallel>], iteration_bounds = array<i64: 1>, scalar_prefetch = 0 : i64, scratch_operands = 0 : i64, tpu.core_type = #tpu.core_type<tc>, window_params = [{transform_indices = @transform_0, window_bounds = array<i64: 8, 768>}, {pipeline_mode = #tpu.pipeline_mode<synchronous>, transform_indices = @transform_1, window_bounds = array<i64: 768, 768>}, {pipeline_mode = #tpu.pipeline_mode<synchronous>, transform_indices = @transform_2, window_bounds = array<i64: 1, 768>}, {transform_indices = @transform_3, window_bounds = array<i64: 8, 768>}]} {
    %c0 = arith.constant 0 : index
    %c0_0 = arith.constant 0 : index
    %0 = vector.load %arg1[%c0, %c0_0] : memref<8x768xbf16, #tpu.memory_space<vmem>>, vector<8x768xbf16>
    %c0_1 = arith.constant 0 : index
    %c0_2 = arith.constant 0 : index
    %1 = vector.load %arg2[%c0_1, %c0_2] : memref<768x768xbf16, #tpu.memory_space<vmem>>, vector<768x768xbf16>
    %cst = arith.constant dense<0.000000e+00> : vector<8x768xf32>
    %2 = tpu.matmul %0, %1, %cst {dimension_numbers = #tpu.dot_dimension_numbers<[1], [0], [0], [1], [0, 0, 1, 1], [], []>} : vector<8x768xbf16>, vector<768x768xbf16>, vector<8x768xf32> -> vector<8x768xf32>
    %c0_3 = arith.constant 0 : index
    %c0_4 = arith.constant 0 : index
    %3 = vector.load %arg3[%c0_3, %c0_4] : memref<1x768xf32, #tpu.memory_space<vmem>>, vector<1x768xf32>
    %4 = vector.broadcast %3 : vector<1x768xf32> to vector<8x768xf32>
    %5 = arith.addf %2, %4 : vector<8x768xf32>
    %6 = arith.truncf %5 : vector<8x768xf32> to vector<8x768xbf16>
    %c0_5 = arith.constant 0 : index
    %c0_6 = arith.constant 0 : index
    %7 = vector.load %arg4[%c0_5, %c0_6] : memref<8x768xbf16, #tpu.memory_space<vmem>>, vector<8x768xbf16>
    tpu.vector_store %arg4[%c0_5, %c0_6], %6 {strides = array<i32>} : memref<8x768xbf16, #tpu.memory_space<vmem>>, vector<8x768xbf16>,
    return
  }
  func.func @transform_0(%arg0: i32) -> (i32, i32) {
    %c0_i32 = arith.constant 0 : i32
    %c0_i32_0 = arith.constant 0 : i32
    return %arg0, %c0_i32 : i32, i32
  }
  func.func @transform_1(%arg0: i32) -> (i32, i32) {
    %c0_i32 = arith.constant 0 : i32
    %c0_i32_0 = arith.constant 0 : i32
    %c0_i32_1 = arith.constant 0 : i32
    return %c0_i32, %c0_i32_0 : i32, i32
  }
  func.func @transform_2(%arg0: i32) -> (i32, i32) {
    %c0_i32 = arith.constant 0 : i32
    %c0_i32_0 = arith.constant 0 : i32
    %c0_i32_1 = arith.constant 0 : i32
    return %c0_i32, %c0_i32_0 : i32, i32
  }
  func.func @transform_3(%arg0: i32) -> (i32, i32) {
    %c0_i32 = arith.constant 0 : i32
    %c0_i32_0 = arith.constant 0 : i32
    return %arg0, %c0_i32 : i32, i32
  }
}

</mosaic_0001>

<llo_original>
// kernel: patcher_conv_forward.1
$region0: #{patcher_conv_forward.1}
  #allocation0 [shape = 'u32[]', space=smem, size = 0x4, offset = 0x4, fixed_abs, tag = 'smem constant byte address 0x4 - core index']
  #allocation1 [shape = 'u32[144,128]{1,0:T(1,128)}', space=vmem, size = 0x12000, scoped, tag = 'internal scratch']
  %s0 = inlined_call_operand.vmem [shape: bf16[8,768], index: 0, kind: input, shape index: {}]
  %s1 = inlined_call_operand.vmem [shape: bf16[768,768], index: 1, kind: input, shape index: {}]
  %s2 = inlined_call_operand.vmem [shape: f32[1,768], index: 2, kind: input, shape index: {}]
  %s3 = inlined_call_operand.vmem [shape: bf16[8,768], index: 3, kind: output, shape index: {}]
  %s4 = sld [smem:[#allocation0]]
  $region22: #{patcher_conv_forward.1} parent=0
    _
  %s6 = ssub.s32 1, %s4
  %s7 = scalar_select 0, %s6, %s4
  // Predicated region
  $region2: #{patcher_conv_forward.1} parent=0 // pred_check
    _
  $region3: #{patcher_conv_forward.1} parent=0 // pred_check_branch
    %9 = sbr.rel (0) target = $region5
  $region4: #{patcher_conv_forward.1} parent=0 // pred_region
    _
  $region5: #{patcher_conv_forward.1} parent=0 // pred_fallthru
    _
  // Predicated region
  $region6: #{patcher_conv_forward.1} parent=0 // pred_check
    _
  $region7: #{patcher_conv_forward.1} parent=0 // pred_check_branch
    %11 = sbr.rel (0) target = $region9
  $region8: #{patcher_conv_forward.1} parent=0 // pred_region
    _
  $region9: #{patcher_conv_forward.1} parent=0 // pred_fallthru
    _
  // Predicated region
  $region10: #{patcher_conv_forward.1} parent=0 // pred_check
    _
  $region11: #{patcher_conv_forward.1} parent=0 // pred_check_branch
    %13 = sbr.rel (0) target = $region13
  $region12: #{patcher_conv_forward.1} parent=0 // pred_region
    _
  $region13: #{patcher_conv_forward.1} parent=0 // pred_fallthru
    _
  %v14 = vld [vmem:[%s0] sm:$0xff]
  %v15 = vld [vmem:[%s0 + $0x8] sm:$0xff]
  %v16 = vld [vmem:[%s0 + $0x10] sm:$0xff]
  %v17 = vld [vmem:[%s1] sm:$0xff]
  %v18 = vld [vmem:[%s1 + $0x8] sm:$0xff]
  %v19 = vld [vmem:[%s1 + $0x10] sm:$0xff]
  %v20 = vld [vmem:[%s1 + $0x18] sm:$0xff]
  %v21 = vld [vmem:[%s1 + $0x20] sm:$0xff]
  %v22 = vld [vmem:[%s1 + $0x28] sm:$0xff]
  %v23 = vld [vmem:[%s1 + $0x30] sm:$0xff]
  %v24 = vld [vmem:[%s1 + $0x38] sm:$0xff]
  %v25 = vld [vmem:[%s1 + $0x40] sm:$0xff]
  %v26 = vld [vmem:[%s1 + $0x48] sm:$0xff]
  %v27 = vld [vmem:[%s1 + $0x50] sm:$0xff]
  %v28 = vld [vmem:[%s1 + $0x58] sm:$0xff]
  %v29 = vld [vmem:[%s1 + $0x60] sm:$0xff]
  %v30 = vld [vmem:[%s1 + $0x68] sm:$0xff]
  %v31 = vld [vmem:[%s1 + $0x70] sm:$0xff]
  %v32 = vld [vmem:[%s1 + $0x78] sm:$0xff]
  %v33 = vld [vmem:[%s1 + $0x80] sm:$0xff]
  %v34 = vld [vmem:[%s1 + $0x88] sm:$0xff]
  %v35 = vld [vmem:[%s1 + $0x90] sm:$0xff]
  %v36 = vld [vmem:[%s1 + $0x98] sm:$0xff]
  %v37 = vld [vmem:[%s1 + $0xa0] sm:$0xff]
  %v38 = vld [vmem:[%s1 + $0xa8] sm:$0xff]
  %v39 = vld [vmem:[%s1 + $0xb0] sm:$0xff]
  %v40 = vld [vmem:[%s1 + $0xb8] sm:$0xff]
  %v41 = vld [vmem:[%s1 + $0xc0] sm:$0xff]
  %v42 = vld [vmem:[%s1 + $0xc8] sm:$0xff]
  %v43 = vld [vmem:[%s1 + $0xd0] sm:$0xff]
  %v44 = vld [vmem:[%s1 + $0xd8] sm:$0xff]
  %v45 = vld [vmem:[%s1 + $0xe0] sm:$0xff]
  %v46 = vld [vmem:[%s1 + $0xe8] sm:$0xff]
  %v47 = vld [vmem:[%s1 + $0xf0] sm:$0xff]
  %v48 = vld [vmem:[%s1 + $0xf8] sm:$0xff]
  %v49 = vld [vmem:[%s1 + $0x100] sm:$0xff]
  %v50 = vld [vmem:[%s1 + $0x108] sm:$0xff]
  %v51 = vld [vmem:[%s1 + $0x110] sm:$0xff]
  %v52 = vld [vmem:[%s1 + $0x118] sm:$0xff]
  %v53 = vld [vmem:[%s1 + $0x120] sm:$0xff]
  %v54 = vld [vmem:[%s1 + $0x128] sm:$0xff]
  %v55 = vld [vmem:[%s1 + $0x130] sm:$0xff]
  %v56 = vld [vmem:[%s1 + $0x138] sm:$0xff]
  %v57 = vld [vmem:[%s1 + $0x140] sm:$0xff]
  %v58 = vld [vmem:[%s1 + $0x148] sm:$0xff]
  %v59 = vld [vmem:[%s1 + $0x150] sm:$0xff]
  %v60 = vld [vmem:[%s1 + $0x158] sm:$0xff]
  %v61 = vld [vmem:[%s1 + $0x160] sm:$0xff]
  %v62 = vld [vmem:[%s1 + $0x168] sm:$0xff]
  %v63 = vld [vmem:[%s1 + $0x170] sm:$0xff]
  %v64 = vld [vmem:[%s1 + $0x178] sm:$0xff]
  %v65 = vld [vmem:[%s1 + $0x180] sm:$0xff]
  %v66 = vld [vmem:[%s1 + $0x188] sm:$0xff]
  %v67 = vld [vmem:[%s1 + $0x190] sm:$0xff]
  %v68 = vld [vmem:[%s1 + $0x198] sm:$0xff]
  %v69 = vld [vmem:[%s1 + $0x1a0] sm:$0xff]
  %v70 = vld [vmem:[%s1 + $0x1a8] sm:$0xff]
  %v71 = vld [vmem:[%s1 + $0x1b0] sm:$0xff]
  %v72 = vld [vmem:[%s1 + $0x1b8] sm:$0xff]
  %v73 = vld [vmem:[%s1 + $0x1c0] sm:$0xff]
  %v74 = vld [vmem:[%s1 + $0x1c8] sm:$0xff]
  %v75 = vld [vmem:[%s1 + $0x1d0] sm:$0xff]
  %v76 = vld [vmem:[%s1 + $0x1d8] sm:$0xff]
  %v77 = vld [vmem:[%s1 + $0x1e0] sm:$0xff]
  %v78 = vld [vmem:[%s1 + $0x1e8] sm:$0xff]
  %v79 = vld [vmem:[%s1 + $0x1f0] sm:$0xff]
  %v80 = vld [vmem:[%s1 + $0x1f8] sm:$0xff]
  %v81 = vld [vmem:[%s1 + $0x200] sm:$0xff]
  %v82 = vld [vmem:[%s1 + $0x208] sm:$0xff]
  %v83 = vld [vmem:[%s1 + $0x210] sm:$0xff]
  %v84 = vld [vmem:[%s1 + $0x218] sm:$0xff]
  %v85 = vld [vmem:[%s1 + $0x220] sm:$0xff]
  %v86 = vld [vmem:[%s1 + $0x228] sm:$0xff]
  %v87 = vld [vmem:[%s1 + $0x230] sm:$0xff]
  %v88 = vld [vmem:[%s1 + $0x238] sm:$0xff]
  %v89 = vld [vmem:[%s1 + $0x240] sm:$0xff]
  %v90 = vld [vmem:[%s1 + $0x248] sm:$0xff]
  %v91 = vld [vmem:[%s1 + $0x250] sm:$0xff]
  %v92 = vld [vmem:[%s1 + $0x258] sm:$0xff]
  %v93 = vld [vmem:[%s1 + $0x260] sm:$0xff]
  %v94 = vld [vmem:[%s1 + $0x268] sm:$0xff]
  %v95 = vld [vmem:[%s1 + $0x270] sm:$0xff]
  %v96 = vld [vmem:[%s1 + $0x278] sm:$0xff]
  %v97 = vld [vmem:[%s1 + $0x280] sm:$0xff]
  %v98 = vld [vmem:[%s1 + $0x288] sm:$0xff]
  %v99 = vld [vmem:[%s1 + $0x290] sm:$0xff]
  %v100 = vld [vmem:[%s1 + $0x298] sm:$0xff]
  %v101 = vld [vmem:[%s1 + $0x2a0] sm:$0xff]
  %v102 = vld [vmem:[%s1 + $0x2a8] sm:$0xff]
  %v103 = vld [vmem:[%s1 + $0x2b0] sm:$0xff]
  %v104 = vld [vmem:[%s1 + $0x2b8] sm:$0xff]
  %v105 = vld [vmem:[%s1 + $0x2c0] sm:$0xff]
  %v106 = vld [vmem:[%s1 + $0x2c8] sm:$0xff]
  %v107 = vld [vmem:[%s1 + $0x2d0] sm:$0xff]
  %v108 = vld [vmem:[%s1 + $0x2d8] sm:$0xff]
  %v109 = vld [vmem:[%s1 + $0x2e0] sm:$0xff]
  %v110 = vld [vmem:[%s1 + $0x2e8] sm:$0xff]
  %v111 = vld [vmem:[%s1 + $0x2f0] sm:$0xff]
  %v112 = vld [vmem:[%s1 + $0x2f8] sm:$0xff]
  %v113 = vld [vmem:[%s1 + $0x300] sm:$0xff]
  %v114 = vld [vmem:[%s1 + $0x308] sm:$0xff]
  %v115 = vld [vmem:[%s1 + $0x310] sm:$0xff]
  %v116 = vld [vmem:[%s1 + $0x318] sm:$0xff]
  %v117 = vld [vmem:[%s1 + $0x320] sm:$0xff]
  %v118 = vld [vmem:[%s1 + $0x328] sm:$0xff]
  %v119 = vld [vmem:[%s1 + $0x330] sm:$0xff]
  %v120 = vld [vmem:[%s1 + $0x338] sm:$0xff]
  %v121 = vld [vmem:[%s1 + $0x340] sm:$0xff]
  %v122 = vld [vmem:[%s1 + $0x348] sm:$0xff]
  %v123 = vld [vmem:[%s1 + $0x350] sm:$0xff]
  %v124 = vld [vmem:[%s1 + $0x358] sm:$0xff]
  %v125 = vld [vmem:[%s1 + $0x360] sm:$0xff]
  %v126 = vld [vmem:[%s1 + $0x368] sm:$0xff]
  %v127 = vld [vmem:[%s1 + $0x370] sm:$0xff]
  %v128 = vld [vmem:[%s1 + $0x378] sm:$0xff]
  %v129 = vld [vmem:[%s1 + $0x380] sm:$0xff]
  %v130 = vld [vmem:[%s1 + $0x388] sm:$0xff]
  %v131 = vld [vmem:[%s1 + $0x390] sm:$0xff]
  %v132 = vld [vmem:[%s1 + $0x398] sm:$0xff]
  %v133 = vld [vmem:[%s1 + $0x3a0] sm:$0xff]
  %v134 = vld [vmem:[%s1 + $0x3a8] sm:$0xff]
  %v135 = vld [vmem:[%s1 + $0x3b0] sm:$0xff]
  %v136 = vld [vmem:[%s1 + $0x3b8] sm:$0xff]
  %v137 = vld [vmem:[%s1 + $0x3c0] sm:$0xff]
  %v138 = vld [vmem:[%s1 + $0x3c8] sm:$0xff]
  %v139 = vld [vmem:[%s1 + $0x3d0] sm:$0xff]
  %v140 = vld [vmem:[%s1 + $0x3d8] sm:$0xff]
  %v141 = vld [vmem:[%s1 + $0x3e0] sm:$0xff]
  %v142 = vld [vmem:[%s1 + $0x3e8] sm:$0xff]
  %v143 = vld [vmem:[%s1 + $0x3f0] sm:$0xff]
  %v144 = vld [vmem:[%s1 + $0x3f8] sm:$0xff]
  %v145 = vld [vmem:[%s1 + $0x400] sm:$0xff]
  %v146 = vld [vmem:[%s1 + $0x408] sm:$0xff]
  %v147 = vld [vmem:[%s1 + $0x410] sm:$0xff]
  %v148 = vld [vmem:[%s1 + $0x418] sm:$0xff]
  %v149 = vld [vmem:[%s1 + $0x420] sm:$0xff]
  %v150 = vld [vmem:[%s1 + $0x428] sm:$0xff]
  %v151 = vld [vmem:[%s1 + $0x430] sm:$0xff]
  %v152 = vld [vmem:[%s1 + $0x438] sm:$0xff]
  %v153 = vld [vmem:[%s1 + $0x440] sm:$0xff]
  %v154 = vld [vmem:[%s1 + $0x448] sm:$0xff]
  %v155 = vld [vmem:[%s1 + $0x450] sm:$0xff]
  %v156 = vld [vmem:[%s1 + $0x458] sm:$0xff]
  %v157 = vld [vmem:[%s1 + $0x460] sm:$0xff]
  %v158 = vld [vmem:[%s1 + $0x468] sm:$0xff]
  %v159 = vld [vmem:[%s1 + $0x470] sm:$0xff]
  %v160 = vld [vmem:[%s1 + $0x478] sm:$0xff]
  %v161 = vld [vmem:[%s1 + $0x480] sm:$0xff]
  %v162 = vld [vmem:[%s1 + $0x488] sm:$0xff]
  %v163 = vld [vmem:[%s1 + $0x490] sm:$0xff]
  %v164 = vld [vmem:[%s1 + $0x498] sm:$0xff]
  %v165 = vld [vmem:[%s1 + $0x4a0] sm:$0xff]
  %v166 = vld [vmem:[%s1 + $0x4a8] sm:$0xff]
  %v167 = vld [vmem:[%s1 + $0x4b0] sm:$0xff]
  %v168 = vld [vmem:[%s1 + $0x4b8] sm:$0xff]
  %v169 = vld [vmem:[%s1 + $0x4c0] sm:$0xff]
  %v170 = vld [vmem:[%s1 + $0x4c8] sm:$0xff]
  %v171 = vld [vmem:[%s1 + $0x4d0] sm:$0xff]
  %v172 = vld [vmem:[%s1 + $0x4d8] sm:$0xff]
  %v173 = vld [vmem:[%s1 + $0x4e0] sm:$0xff]
  %v174 = vld [vmem:[%s1 + $0x4e8] sm:$0xff]
  %v175 = vld [vmem:[%s1 + $0x4f0] sm:$0xff]
  %v176 = vld [vmem:[%s1 + $0x4f8] sm:$0xff]
  %v177 = vld [vmem:[%s1 + $0x500] sm:$0xff]
  %v178 = vld [vmem:[%s1 + $0x508] sm:$0xff]
  %v179 = vld [vmem:[%s1 + $0x510] sm:$0xff]
  %v180 = vld [vmem:[%s1 + $0x518] sm:$0xff]
  %v181 = vld [vmem:[%s1 + $0x520] sm:$0xff]
  %v182 = vld [vmem:[%s1 + $0x528] sm:$0xff]
  %v183 = vld [vmem:[%s1 + $0x530] sm:$0xff]
  %v184 = vld [vmem:[%s1 + $0x538] sm:$0xff]
  %v185 = vld [vmem:[%s1 + $0x540] sm:$0xff]
  %v186 = vld [vmem:[%s1 + $0x548] sm:$0xff]
  %v187 = vld [vmem:[%s1 + $0x550] sm:$0xff]
  %v188 = vld [vmem:[%s1 + $0x558] sm:$0xff]
  %v189 = vld [vmem:[%s1 + $0x560] sm:$0xff]
  %v190 = vld [vmem:[%s1 + $0x568] sm:$0xff]
  %v191 = vld [vmem:[%s1 + $0x570] sm:$0xff]
  %v192 = vld [vmem:[%s1 + $0x578] sm:$0xff]
  %v193 = vld [vmem:[%s1 + $0x580] sm:$0xff]
  %v194 = vld [vmem:[%s1 + $0x588] sm:$0xff]
  %v195 = vld [vmem:[%s1 + $0x590] sm:$0xff]
  %v196 = vld [vmem:[%s1 + $0x598] sm:$0xff]
  %v197 = vld [vmem:[%s1 + $0x5a0] sm:$0xff]
  %v198 = vld [vmem:[%s1 + $0x5a8] sm:$0xff]
  %v199 = vld [vmem:[%s1 + $0x5b0] sm:$0xff]
  %v200 = vld [vmem:[%s1 + $0x5b8] sm:$0xff]
  %v201 = vld [vmem:[%s1 + $0x5c0] sm:$0xff]
  %v202 = vld [vmem:[%s1 + $0x5c8] sm:$0xff]
  %v203 = vld [vmem:[%s1 + $0x5d0] sm:$0xff]
  %v204 = vld [vmem:[%s1 + $0x5d8] sm:$0xff]
  %v205 = vld [vmem:[%s1 + $0x5e0] sm:$0xff]
  %v206 = vld [vmem:[%s1 + $0x5e8] sm:$0xff]
  %v207 = vld [vmem:[%s1 + $0x5f0] sm:$0xff]
  %v208 = vld [vmem:[%s1 + $0x5f8] sm:$0xff]
  %v209 = vld [vmem:[%s1 + $0x600] sm:$0xff]
  %v210 = vld [vmem:[%s1 + $0x608] sm:$0xff]
  %v211 = vld [vmem:[%s1 + $0x610] sm:$0xff]
  %v212 = vld [vmem:[%s1 + $0x618] sm:$0xff]
  %v213 = vld [vmem:[%s1 + $0x620] sm:$0xff]
  %v214 = vld [vmem:[%s1 + $0x628] sm:$0xff]
  %v215 = vld [vmem:[%s1 + $0x630] sm:$0xff]
  %v216 = vld [vmem:[%s1 + $0x638] sm:$0xff]
  %v217 = vld [vmem:[%s1 + $0x640] sm:$0xff]
  %v218 = vld [vmem:[%s1 + $0x648] sm:$0xff]
  %v219 = vld [vmem:[%s1 + $0x650] sm:$0xff]
  %v220 = vld [vmem:[%s1 + $0x658] sm:$0xff]
  %v221 = vld [vmem:[%s1 + $0x660] sm:$0xff]
  %v222 = vld [vmem:[%s1 + $0x668] sm:$0xff]
  %v223 = vld [vmem:[%s1 + $0x670] sm:$0xff]
  %v224 = vld [vmem:[%s1 + $0x678] sm:$0xff]
  %v225 = vld [vmem:[%s1 + $0x680] sm:$0xff]
  %v226 = vld [vmem:[%s1 + $0x688] sm:$0xff]
  %v227 = vld [vmem:[%s1 + $0x690] sm:$0xff]
  %v228 = vld [vmem:[%s1 + $0x698] sm:$0xff]
  %v229 = vld [vmem:[%s1 + $0x6a0] sm:$0xff]
  %v230 = vld [vmem:[%s1 + $0x6a8] sm:$0xff]
  %v231 = vld [vmem:[%s1 + $0x6b0] sm:$0xff]
  %v232 = vld [vmem:[%s1 + $0x6b8] sm:$0xff]
  %v233 = vld [vmem:[%s1 + $0x6c0] sm:$0xff]
  %v234 = vld [vmem:[%s1 + $0x6c8] sm:$0xff]
  %v235 = vld [vmem:[%s1 + $0x6d0] sm:$0xff]
  %v236 = vld [vmem:[%s1 + $0x6d8] sm:$0xff]
  %v237 = vld [vmem:[%s1 + $0x6e0] sm:$0xff]
  %v238 = vld [vmem:[%s1 + $0x6e8] sm:$0xff]
  %v239 = vld [vmem:[%s1 + $0x6f0] sm:$0xff]
  %v240 = vld [vmem:[%s1 + $0x6f8] sm:$0xff]
  %v241 = vld [vmem:[%s1 + $0x700] sm:$0xff]
  %v242 = vld [vmem:[%s1 + $0x708] sm:$0xff]
  %v243 = vld [vmem:[%s1 + $0x710] sm:$0xff]
  %v244 = vld [vmem:[%s1 + $0x718] sm:$0xff]
  %v245 = vld [vmem:[%s1 + $0x720] sm:$0xff]
  %v246 = vld [vmem:[%s1 + $0x728] sm:$0xff]
  %v247 = vld [vmem:[%s1 + $0x730] sm:$0xff]
  %v248 = vld [vmem:[%s1 + $0x738] sm:$0xff]
  %v249 = vld [vmem:[%s1 + $0x740] sm:$0xff]
  %v250 = vld [vmem:[%s1 + $0x748] sm:$0xff]
  %v251 = vld [vmem:[%s1 + $0x750] sm:$0xff]
  %v252 = vld [vmem:[%s1 + $0x758] sm:$0xff]
  %v253 = vld [vmem:[%s1 + $0x760] sm:$0xff]
  %v254 = vld [vmem:[%s1 + $0x768] sm:$0xff]
  %v255 = vld [vmem:[%s1 + $0x770] sm:$0xff]
  %v256 = vld [vmem:[%s1 + $0x778] sm:$0xff]
  %v257 = vld [vmem:[%s1 + $0x780] sm:$0xff]
  %v258 = vld [vmem:[%s1 + $0x788] sm:$0xff]
  %v259 = vld [vmem:[%s1 + $0x790] sm:$0xff]
  %v260 = vld [vmem:[%s1 + $0x798] sm:$0xff]
  %v261 = vld [vmem:[%s1 + $0x7a0] sm:$0xff]
  %v262 = vld [vmem:[%s1 + $0x7a8] sm:$0xff]
  %v263 = vld [vmem:[%s1 + $0x7b0] sm:$0xff]
  %v264 = vld [vmem:[%s1 + $0x7b8] sm:$0xff]
  %v265 = vld [vmem:[%s1 + $0x7c0] sm:$0xff]
  %v266 = vld [vmem:[%s1 + $0x7c8] sm:$0xff]
  %v267 = vld [vmem:[%s1 + $0x7d0] sm:$0xff]
  %v268 = vld [vmem:[%s1 + $0x7d8] sm:$0xff]
  %v269 = vld [vmem:[%s1 + $0x7e0] sm:$0xff]
  %v270 = vld [vmem:[%s1 + $0x7e8] sm:$0xff]
  %v271 = vld [vmem:[%s1 + $0x7f0] sm:$0xff]
  %v272 = vld [vmem:[%s1 + $0x7f8] sm:$0xff]
  %v273 = vld [vmem:[%s1 + $0x800] sm:$0xff]
  %v274 = vld [vmem:[%s1 + $0x808] sm:$0xff]
  %v275 = vld [vmem:[%s1 + $0x810] sm:$0xff]
  %v276 = vld [vmem:[%s1 + $0x818] sm:$0xff]
  %v277 = vld [vmem:[%s1 + $0x820] sm:$0xff]
  %v278 = vld [vmem:[%s1 + $0x828] sm:$0xff]
  %v279 = vld [vmem:[%s1 + $0x830] sm:$0xff]
  %v280 = vld [vmem:[%s1 + $0x838] sm:$0xff]
  %v281 = vld [vmem:[%s1 + $0x840] sm:$0xff]
  %v282 = vld [vmem:[%s1 + $0x848] sm:$0xff]
  %v283 = vld [vmem:[%s1 + $0x850] sm:$0xff]
  %v284 = vld [vmem:[%s1 + $0x858] sm:$0xff]
  %v285 = vld [vmem:[%s1 + $0x860] sm:$0xff]
  %v286 = vld [vmem:[%s1 + $0x868] sm:$0xff]
  %v287 = vld [vmem:[%s1 + $0x870] sm:$0xff]
  %v288 = vld [vmem:[%s1 + $0x878] sm:$0xff]
  %v289 = vld [vmem:[%s1 + $0x880] sm:$0xff]
  %v290 = vld [vmem:[%s1 + $0x888] sm:$0xff]
  %v291 = vld [vmem:[%s1 + $0x890] sm:$0xff]
  %v292 = vld [vmem:[%s1 + $0x898] sm:$0xff]
  %v293 = vld [vmem:[%s1 + $0x8a0] sm:$0xff]
  %v294 = vld [vmem:[%s1 + $0x8a8] sm:$0xff]
  %v295 = vld [vmem:[%s1 + $0x8b0] sm:$0xff]
  %v296 = vld [vmem:[%s1 + $0x8b8] sm:$0xff]
  %v297 = vld [vmem:[%s1 + $0x8c0] sm:$0xff]
  %v298 = vld [vmem:[%s1 + $0x8c8] sm:$0xff]
  %v299 = vld [vmem:[%s1 + $0x8d0] sm:$0xff]
  %v300 = vld [vmem:[%s1 + $0x8d8] sm:$0xff]
  %v301 = vld [vmem:[%s1 + $0x8e0] sm:$0xff]
  %v302 = vld [vmem:[%s1 + $0x8e8] sm:$0xff]
  %v303 = vld [vmem:[%s1 + $0x8f0] sm:$0xff]
  %v304 = vld [vmem:[%s1 + $0x8f8] sm:$0xff]
  %v305 = vld [vmem:[%s2] sm:$0x3f]
  %v307 = vlaneseq
  %v308 = vshrl.u32 %v307, 7
  %v309 = vsub.s32 0, %v308
  %v310 = vrot.slane %v305, %v309
  %v311 = vlaneseq
  %v312 = vshrl.u32 %v311, 7
  %v313 = vsub.s32 1, %v312
  %v314 = vrot.slane %v305, %v313
  %v315 = vlaneseq
  %v316 = vshrl.u32 %v315, 7
  %v317 = vsub.s32 2, %v316
  %v318 = vrot.slane %v305, %v317
  %v319 = vlaneseq
  %v320 = vshrl.u32 %v319, 7
  %v321 = vsub.s32 3, %v320
  %v322 = vrot.slane %v305, %v321
  %v323 = vlaneseq
  %v324 = vshrl.u32 %v323, 7
  %v325 = vsub.s32 4, %v324
  %v326 = vrot.slane %v305, %v325
  %v327 = vlaneseq
  %v328 = vshrl.u32 %v327, 7
  %v329 = vsub.s32 5, %v328
  %v330 = vrot.slane %v305, %v329
  %v340 = vunpack.c.l.b16 %v14
  %v341 = vunpack.c.h.b16 %v14
  %v342 = vunpack.c.l.b16 %v15
  %v343 = vunpack.c.h.b16 %v15
  %v344 = vunpack.c.l.b16 %v16
  %v345 = vunpack.c.h.b16 %v16
  %v346 = vpack.c.b16 %v340, %v340
  %v347 = vpack.c.b16 %v341, %v341
  %v348 = vpack.c.b16 %v342, %v342
  %v349 = vpack.c.b16 %v343, %v343
  %v350 = vpack.c.b16 %v344, %v344
  %v351 = vpack.c.b16 %v345, %v345
  %v646 = vunpack.c.l.b16 %v17
  %v647 = vunpack.c.h.b16 %v17
  %v648 = vunpack.c.l.b16 %v18
  %v649 = vunpack.c.h.b16 %v18
  %v650 = vunpack.c.l.b16 %v19
  %v651 = vunpack.c.h.b16 %v19
  %v652 = vunpack.c.l.b16 %v20
  %v653 = vunpack.c.h.b16 %v20
  %v654 = vunpack.c.l.b16 %v21
  %v655 = vunpack.c.h.b16 %v21
  %v656 = vunpack.c.l.b16 %v22
  %v657 = vunpack.c.h.b16 %v22
  %v658 = vunpack.c.l.b16 %v23
  %v659 = vunpack.c.h.b16 %v23
  %v660 = vunpack.c.l.b16 %v24
  %v661 = vunpack.c.h.b16 %v24
  %v662 = vunpack.c.l.b16 %v25
  %v663 = vunpack.c.h.b16 %v25
  %v664 = vunpack.c.l.b16 %v26
  %v665 = vunpack.c.h.b16 %v26
  %v666 = vunpack.c.l.b16 %v27
  %v667 = vunpack.c.h.b16 %v27
  %v668 = vunpack.c.l.b16 %v28
  %v669 = vunpack.c.h.b16 %v28
  %v670 = vunpack.c.l.b16 %v29
  %v671 = vunpack.c.h.b16 %v29
  %v672 = vunpack.c.l.b16 %v30
  %v673 = vunpack.c.h.b16 %v30
  %v674 = vunpack.c.l.b16 %v31
  %v675 = vunpack.c.h.b16 %v31
  %v676 = vunpack.c.l.b16 %v32
  %v677 = vunpack.c.h.b16 %v32
  %v678 = vunpack.c.l.b16 %v33
  %v679 = vunpack.c.h.b16 %v33
  %v680 = vunpack.c.l.b16 %v34
  %v681 = vunpack.c.h.b16 %v34
  %v682 = vunpack.c.l.b16 %v35
  %v683 = vunpack.c.h.b16 %v35
  %v684 = vunpack.c.l.b16 %v36
  %v685 = vunpack.c.h.b16 %v36
  %v686 = vunpack.c.l.b16 %v37
  %v687 = vunpack.c.h.b16 %v37
  %v688 = vunpack.c.l.b16 %v38
  %v689 = vunpack.c.h.b16 %v38
  %v690 = vunpack.c.l.b16 %v39
  %v691 = vunpack.c.h.b16 %v39
  %v692 = vunpack.c.l.b16 %v40
  %v693 = vunpack.c.h.b16 %v40
  %v694 = vunpack.c.l.b16 %v41
  %v695 = vunpack.c.h.b16 %v41
  %v696 = vunpack.c.l.b16 %v42
  %v697 = vunpack.c.h.b16 %v42
  %v698 = vunpack.c.l.b16 %v43
  %v699 = vunpack.c.h.b16 %v43
  %v700 = vunpack.c.l.b16 %v44
  %v701 = vunpack.c.h.b16 %v44
  %v702 = vunpack.c.l.b16 %v45
  %v703 = vunpack.c.h.b16 %v45
  %v704 = vunpack.c.l.b16 %v46
  %v705 = vunpack.c.h.b16 %v46
  %v706 = vunpack.c.l.b16 %v47
  %v707 = vunpack.c.h.b16 %v47
  %v708 = vunpack.c.l.b16 %v48
  %v709 = vunpack.c.h.b16 %v48
  %v710 = vunpack.c.l.b16 %v49
  %v711 = vunpack.c.h.b16 %v49
  %v712 = vunpack.c.l.b16 %v50
  %v713 = vunpack.c.h.b16 %v50
  %v714 = vunpack.c.l.b16 %v51
  %v715 = vunpack.c.h.b16 %v51
  %v716 = vunpack.c.l.b16 %v52
  %v717 = vunpack.c.h.b16 %v52
  %v718 = vunpack.c.l.b16 %v53
  %v719 = vunpack.c.h.b16 %v53
  %v720 = vunpack.c.l.b16 %v54
  %v721 = vunpack.c.h.b16 %v54
  %v722 = vunpack.c.l.b16 %v55
  %v723 = vunpack.c.h.b16 %v55
  %v724 = vunpack.c.l.b16 %v56
  %v725 = vunpack.c.h.b16 %v56
  %v726 = vunpack.c.l.b16 %v57
  %v727 = vunpack.c.h.b16 %v57
  %v728 = vunpack.c.l.b16 %v58
  %v729 = vunpack.c.h.b16 %v58
  %v730 = vunpack.c.l.b16 %v59
  %v731 = vunpack.c.h.b16 %v59
  %v732 = vunpack.c.l.b16 %v60
  %v733 = vunpack.c.h.b16 %v60
  %v734 = vunpack.c.l.b16 %v61
  %v735 = vunpack.c.h.b16 %v61
  %v736 = vunpack.c.l.b16 %v62
  %v737 = vunpack.c.h.b16 %v62
  %v738 = vunpack.c.l.b16 %v63
  %v739 = vunpack.c.h.b16 %v63
  %v740 = vunpack.c.l.b16 %v64
  %v741 = vunpack.c.h.b16 %v64
  %v742 = vunpack.c.l.b16 %v65
  %v743 = vunpack.c.h.b16 %v65
  %v744 = vunpack.c.l.b16 %v66
  %v745 = vunpack.c.h.b16 %v66
  %v746 = vunpack.c.l.b16 %v67
  %v747 = vunpack.c.h.b16 %v67
  %v748 = vunpack.c.l.b16 %v68
  %v749 = vunpack.c.h.b16 %v68
  %v750 = vunpack.c.l.b16 %v69
  %v751 = vunpack.c.h.b16 %v69
  %v752 = vunpack.c.l.b16 %v70
  %v753 = vunpack.c.h.b16 %v70
  %v754 = vunpack.c.l.b16 %v71
  %v755 = vunpack.c.h.b16 %v71
  %v756 = vunpack.c.l.b16 %v72
  %v757 = vunpack.c.h.b16 %v72
  %v758 = vunpack.c.l.b16 %v73
  %v759 = vunpack.c.h.b16 %v73
  %v760 = vunpack.c.l.b16 %v74
  %v761 = vunpack.c.h.b16 %v74
  %v762 = vunpack.c.l.b16 %v75
  %v763 = vunpack.c.h.b16 %v75
  %v764 = vunpack.c.l.b16 %v76
  %v765 = vunpack.c.h.b16 %v76
  %v766 = vunpack.c.l.b16 %v77
  %v767 = vunpack.c.h.b16 %v77
  %v768 = vunpack.c.l.b16 %v78
  %v769 = vunpack.c.h.b16 %v78
  %v770 = vunpack.c.l.b16 %v79
  %v771 = vunpack.c.h.b16 %v79
  %v772 = vunpack.c.l.b16 %v80
  %v773 = vunpack.c.h.b16 %v80
  %v774 = vunpack.c.l.b16 %v81
  %v775 = vunpack.c.h.b16 %v81
  %v776 = vunpack.c.l.b16 %v82
  %v777 = vunpack.c.h.b16 %v82
  %v778 = vunpack.c.l.b16 %v83
  %v779 = vunpack.c.h.b16 %v83
  %v780 = vunpack.c.l.b16 %v84
  %v781 = vunpack.c.h.b16 %v84
  %v782 = vunpack.c.l.b16 %v85
  %v783 = vunpack.c.h.b16 %v85
  %v784 = vunpack.c.l.b16 %v86
  %v785 = vunpack.c.h.b16 %v86
  %v786 = vunpack.c.l.b16 %v87
  %v787 = vunpack.c.h.b16 %v87
  %v788 = vunpack.c.l.b16 %v88
  %v789 = vunpack.c.h.b16 %v88
  %v790 = vunpack.c.l.b16 %v89
  %v791 = vunpack.c.h.b16 %v89
  %v792 = vunpack.c.l.b16 %v90
  %v793 = vunpack.c.h.b16 %v90
  %v794 = vunpack.c.l.b16 %v91
  %v795 = vunpack.c.h.b16 %v91
  %v796 = vunpack.c.l.b16 %v92
  %v797 = vunpack.c.h.b16 %v92
  %v798 = vunpack.c.l.b16 %v93
  %v799 = vunpack.c.h.b16 %v93
  %v800 = vunpack.c.l.b16 %v94
  %v801 = vunpack.c.h.b16 %v94
  %v802 = vunpack.c.l.b16 %v95
  %v803 = vunpack.c.h.b16 %v95
  %v804 = vunpack.c.l.b16 %v96
  %v805 = vunpack.c.h.b16 %v96
  %v806 = vunpack.c.l.b16 %v97
  %v807 = vunpack.c.h.b16 %v97
  %v808 = vunpack.c.l.b16 %v98
  %v809 = vunpack.c.h.b16 %v98
  %v810 = vunpack.c.l.b16 %v99
  %v811 = vunpack.c.h.b16 %v99
  %v812 = vunpack.c.l.b16 %v100
  %v813 = vunpack.c.h.b16 %v100
  %v814 = vunpack.c.l.b16 %v101
  %v815 = vunpack.c.h.b16 %v101
  %v816 = vunpack.c.l.b16 %v102
  %v817 = vunpack.c.h.b16 %v102
  %v818 = vunpack.c.l.b16 %v103
  %v819 = vunpack.c.h.b16 %v103
  %v820 = vunpack.c.l.b16 %v104
  %v821 = vunpack.c.h.b16 %v104
  %v822 = vunpack.c.l.b16 %v105
  %v823 = vunpack.c.h.b16 %v105
  %v824 = vunpack.c.l.b16 %v106
  %v825 = vunpack.c.h.b16 %v106
  %v826 = vunpack.c.l.b16 %v107
  %v827 = vunpack.c.h.b16 %v107
  %v828 = vunpack.c.l.b16 %v108
  %v829 = vunpack.c.h.b16 %v108
  %v830 = vunpack.c.l.b16 %v109
  %v831 = vunpack.c.h.b16 %v109
  %v832 = vunpack.c.l.b16 %v110
  %v833 = vunpack.c.h.b16 %v110
  %v834 = vunpack.c.l.b16 %v111
  %v835 = vunpack.c.h.b16 %v111
  %v836 = vunpack.c.l.b16 %v112
  %v837 = vunpack.c.h.b16 %v112
  %v838 = vunpack.c.l.b16 %v113
  %v839 = vunpack.c.h.b16 %v113
  %v840 = vunpack.c.l.b16 %v114
  %v841 = vunpack.c.h.b16 %v114
  %v842 = vunpack.c.l.b16 %v115
  %v843 = vunpack.c.h.b16 %v115
  %v844 = vunpack.c.l.b16 %v116
  %v845 = vunpack.c.h.b16 %v116
  %v846 = vunpack.c.l.b16 %v117
  %v847 = vunpack.c.h.b16 %v117
  %v848 = vunpack.c.l.b16 %v118
  %v849 = vunpack.c.h.b16 %v118
  %v850 = vunpack.c.l.b16 %v119
  %v851 = vunpack.c.h.b16 %v119
  %v852 = vunpack.c.l.b16 %v120
  %v853 = vunpack.c.h.b16 %v120
  %v854 = vunpack.c.l.b16 %v121
  %v855 = vunpack.c.h.b16 %v121
  %v856 = vunpack.c.l.b16 %v122
  %v857 = vunpack.c.h.b16 %v122
  %v858 = vunpack.c.l.b16 %v123
  %v859 = vunpack.c.h.b16 %v123
  %v860 = vunpack.c.l.b16 %v124
  %v861 = vunpack.c.h.b16 %v124
  %v862 = vunpack.c.l.b16 %v125
  %v863 = vunpack.c.h.b16 %v125
  %v864 = vunpack.c.l.b16 %v126
  %v865 = vunpack.c.h.b16 %v126
  %v866 = vunpack.c.l.b16 %v127
  %v867 = vunpack.c.h.b16 %v127
  %v868 = vunpack.c.l.b16 %v128
  %v869 = vunpack.c.h.b16 %v128
  %v870 = vunpack.c.l.b16 %v129
  %v871 = vunpack.c.h.b16 %v129
  %v872 = vunpack.c.l.b16 %v130
  %v873 = vunpack.c.h.b16 %v130
  %v874 = vunpack.c.l.b16 %v131
  %v875 = vunpack.c.h.b16 %v131
  %v876 = vunpack.c.l.b16 %v132
  %v877 = vunpack.c.h.b16 %v132
  %v878 = vunpack.c.l.b16 %v133
  %v879 = vunpack.c.h.b16 %v133
  %v880 = vunpack.c.l.b16 %v134
  %v881 = vunpack.c.h.b16 %v134
  %v882 = vunpack.c.l.b16 %v135
  %v883 = vunpack.c.h.b16 %v135
  %v884 = vunpack.c.l.b16 %v136
  %v885 = vunpack.c.h.b16 %v136
  %v886 = vunpack.c.l.b16 %v137
  %v887 = vunpack.c.h.b16 %v137
  %v888 = vunpack.c.l.b16 %v138
  %v889 = vunpack.c.h.b16 %v138
  %v890 = vunpack.c.l.b16 %v139
  %v891 = vunpack.c.h.b16 %v139
  %v892 = vunpack.c.l.b16 %v140
  %v893 = vunpack.c.h.b16 %v140
  %v894 = vunpack.c.l.b16 %v141
  %v895 = vunpack.c.h.b16 %v141
  %v896 = vunpack.c.l.b16 %v142
  %v897 = vunpack.c.h.b16 %v142
  %v898 = vunpack.c.l.b16 %v143
  %v899 = vunpack.c.h.b16 %v143
  %v900 = vunpack.c.l.b16 %v144
  %v901 = vunpack.c.h.b16 %v144
  %v902 = vunpack.c.l.b16 %v145
  %v903 = vunpack.c.h.b16 %v145
  %v904 = vunpack.c.l.b16 %v146
  %v905 = vunpack.c.h.b16 %v146
  %v906 = vunpack.c.l.b16 %v147
  %v907 = vunpack.c.h.b16 %v147
  %v908 = vunpack.c.l.b16 %v148
  %v909 = vunpack.c.h.b16 %v148
  %v910 = vunpack.c.l.b16 %v149
  %v911 = vunpack.c.h.b16 %v149
  %v912 = vunpack.c.l.b16 %v150
  %v913 = vunpack.c.h.b16 %v150
  %v914 = vunpack.c.l.b16 %v151
  %v915 = vunpack.c.h.b16 %v151
  %v916 = vunpack.c.l.b16 %v152
  %v917 = vunpack.c.h.b16 %v152
  %v918 = vunpack.c.l.b16 %v153
  %v919 = vunpack.c.h.b16 %v153
  %v920 = vunpack.c.l.b16 %v154
  %v921 = vunpack.c.h.b16 %v154
  %v922 = vunpack.c.l.b16 %v155
  %v923 = vunpack.c.h.b16 %v155
  %v924 = vunpack.c.l.b16 %v156
  %v925 = vunpack.c.h.b16 %v156
  %v926 = vunpack.c.l.b16 %v157
  %v927 = vunpack.c.h.b16 %v157
  %v928 = vunpack.c.l.b16 %v158
  %v929 = vunpack.c.h.b16 %v158
  %v930 = vunpack.c.l.b16 %v159
  %v931 = vunpack.c.h.b16 %v159
  %v932 = vunpack.c.l.b16 %v160
  %v933 = vunpack.c.h.b16 %v160
  %v934 = vunpack.c.l.b16 %v161
  %v935 = vunpack.c.h.b16 %v161
  %v936 = vunpack.c.l.b16 %v162
  %v937 = vunpack.c.h.b16 %v162
  %v938 = vunpack.c.l.b16 %v163
  %v939 = vunpack.c.h.b16 %v163
  %v940 = vunpack.c.l.b16 %v164
  %v941 = vunpack.c.h.b16 %v164
  %v942 = vunpack.c.l.b16 %v165
  %v943 = vunpack.c.h.b16 %v165
  %v944 = vunpack.c.l.b16 %v166
  %v945 = vunpack.c.h.b16 %v166
  %v946 = vunpack.c.l.b16 %v167
  %v947 = vunpack.c.h.b16 %v167
  %v948 = vunpack.c.l.b16 %v168
  %v949 = vunpack.c.h.b16 %v168
  %v950 = vunpack.c.l.b16 %v169
  %v951 = vunpack.c.h.b16 %v169
  %v952 = vunpack.c.l.b16 %v170
  %v953 = vunpack.c.h.b16 %v170
  %v954 = vunpack.c.l.b16 %v171
  %v955 = vunpack.c.h.b16 %v171
  %v956 = vunpack.c.l.b16 %v172
  %v957 = vunpack.c.h.b16 %v172
  %v958 = vunpack.c.l.b16 %v173
  %v959 = vunpack.c.h.b16 %v173
  %v960 = vunpack.c.l.b16 %v174
  %v961 = vunpack.c.h.b16 %v174
  %v962 = vunpack.c.l.b16 %v175
  %v963 = vunpack.c.h.b16 %v175
  %v964 = vunpack.c.l.b16 %v176
  %v965 = vunpack.c.h.b16 %v176
  %v966 = vunpack.c.l.b16 %v177
  %v967 = vunpack.c.h.b16 %v177
  %v968 = vunpack.c.l.b16 %v178
  %v969 = vunpack.c.h.b16 %v178
  %v970 = vunpack.c.l.b16 %v179
  %v971 = vunpack.c.h.b16 %v179
  %v972 = vunpack.c.l.b16 %v180
  %v973 = vunpack.c.h.b16 %v180
  %v974 = vunpack.c.l.b16 %v181
  %v975 = vunpack.c.h.b16 %v181
  %v976 = vunpack.c.l.b16 %v182
  %v977 = vunpack.c.h.b16 %v182
  %v978 = vunpack.c.l.b16 %v183
  %v979 = vunpack.c.h.b16 %v183
  %v980 = vunpack.c.l.b16 %v184
  %v981 = vunpack.c.h.b16 %v184
  %v982 = vunpack.c.l.b16 %v185
  %v983 = vunpack.c.h.b16 %v185
  %v984 = vunpack.c.l.b16 %v186
  %v985 = vunpack.c.h.b16 %v186
  %v986 = vunpack.c.l.b16 %v187
  %v987 = vunpack.c.h.b16 %v187
  %v988 = vunpack.c.l.b16 %v188
  %v989 = vunpack.c.h.b16 %v188
  %v990 = vunpack.c.l.b16 %v189
  %v991 = vunpack.c.h.b16 %v189
  %v992 = vunpack.c.l.b16 %v190
  %v993 = vunpack.c.h.b16 %v190
  %v994 = vunpack.c.l.b16 %v191
  %v995 = vunpack.c.h.b16 %v191
  %v996 = vunpack.c.l.b16 %v192
  %v997 = vunpack.c.h.b16 %v192
  %v998 = vunpack.c.l.b16 %v193
  %v999 = vunpack.c.h.b16 %v193
  %v1000 = vunpack.c.l.b16 %v194
  %v1001 = vunpack.c.h.b16 %v194
  %v1002 = vunpack.c.l.b16 %v195
  %v1003 = vunpack.c.h.b16 %v195
  %v1004 = vunpack.c.l.b16 %v196
  %v1005 = vunpack.c.h.b16 %v196
  %v1006 = vunpack.c.l.b16 %v197
  %v1007 = vunpack.c.h.b16 %v197
  %v1008 = vunpack.c.l.b16 %v198
  %v1009 = vunpack.c.h.b16 %v198
  %v1010 = vunpack.c.l.b16 %v199
  %v1011 = vunpack.c.h.b16 %v199
  %v1012 = vunpack.c.l.b16 %v200
  %v1013 = vunpack.c.h.b16 %v200
  %v1014 = vunpack.c.l.b16 %v201
  %v1015 = vunpack.c.h.b16 %v201
  %v1016 = vunpack.c.l.b16 %v202
  %v1017 = vunpack.c.h.b16 %v202
  %v1018 = vunpack.c.l.b16 %v203
  %v1019 = vunpack.c.h.b16 %v203
  %v1020 = vunpack.c.l.b16 %v204
  %v1021 = vunpack.c.h.b16 %v204
  %v1022 = vunpack.c.l.b16 %v205
  %v1023 = vunpack.c.h.b16 %v205
  %v1024 = vunpack.c.l.b16 %v206
  %v1025 = vunpack.c.h.b16 %v206
  %v1026 = vunpack.c.l.b16 %v207
  %v1027 = vunpack.c.h.b16 %v207
  %v1028 = vunpack.c.l.b16 %v208
  %v1029 = vunpack.c.h.b16 %v208
  %v1030 = vunpack.c.l.b16 %v209
  %v1031 = vunpack.c.h.b16 %v209
  %v1032 = vunpack.c.l.b16 %v210
  %v1033 = vunpack.c.h.b16 %v210
  %v1034 = vunpack.c.l.b16 %v211
  %v1035 = vunpack.c.h.b16 %v211
  %v1036 = vunpack.c.l.b16 %v212
  %v1037 = vunpack.c.h.b16 %v212
  %v1038 = vunpack.c.l.b16 %v213
  %v1039 = vunpack.c.h.b16 %v213
  %v1040 = vunpack.c.l.b16 %v214
  %v1041 = vunpack.c.h.b16 %v214
  %v1042 = vunpack.c.l.b16 %v215
  %v1043 = vunpack.c.h.b16 %v215
  %v1044 = vunpack.c.l.b16 %v216
  %v1045 = vunpack.c.h.b16 %v216
  %v1046 = vunpack.c.l.b16 %v217
  %v1047 = vunpack.c.h.b16 %v217
  %v1048 = vunpack.c.l.b16 %v218
  %v1049 = vunpack.c.h.b16 %v218
  %v1050 = vunpack.c.l.b16 %v219
  %v1051 = vunpack.c.h.b16 %v219
  %v1052 = vunpack.c.l.b16 %v220
  %v1053 = vunpack.c.h.b16 %v220
  %v1054 = vunpack.c.l.b16 %v221
  %v1055 = vunpack.c.h.b16 %v221
  %v1056 = vunpack.c.l.b16 %v222
  %v1057 = vunpack.c.h.b16 %v222
  %v1058 = vunpack.c.l.b16 %v223
  %v1059 = vunpack.c.h.b16 %v223
  %v1060 = vunpack.c.l.b16 %v224
  %v1061 = vunpack.c.h.b16 %v224
  %v1062 = vunpack.c.l.b16 %v225
  %v1063 = vunpack.c.h.b16 %v225
  %v1064 = vunpack.c.l.b16 %v226
  %v1065 = vunpack.c.h.b16 %v226
  %v1066 = vunpack.c.l.b16 %v227
  %v1067 = vunpack.c.h.b16 %v227
  %v1068 = vunpack.c.l.b16 %v228
  %v1069 = vunpack.c.h.b16 %v228
  %v1070 = vunpack.c.l.b16 %v229
  %v1071 = vunpack.c.h.b16 %v229
  %v1072 = vunpack.c.l.b16 %v230
  %v1073 = vunpack.c.h.b16 %v230
  %v1074 = vunpack.c.l.b16 %v231
  %v1075 = vunpack.c.h.b16 %v231
  %v1076 = vunpack.c.l.b16 %v232
  %v1077 = vunpack.c.h.b16 %v232
  %v1078 = vunpack.c.l.b16 %v233
  %v1079 = vunpack.c.h.b16 %v233
  %v1080 = vunpack.c.l.b16 %v234
  %v1081 = vunpack.c.h.b16 %v234
  %v1082 = vunpack.c.l.b16 %v235
  %v1083 = vunpack.c.h.b16 %v235
  %v1084 = vunpack.c.l.b16 %v236
  %v1085 = vunpack.c.h.b16 %v236
  %v1086 = vunpack.c.l.b16 %v237
  %v1087 = vunpack.c.h.b16 %v237
  %v1088 = vunpack.c.l.b16 %v238
  %v1089 = vunpack.c.h.b16 %v238
  %v1090 = vunpack.c.l.b16 %v239
  %v1091 = vunpack.c.h.b16 %v239
  %v1092 = vunpack.c.l.b16 %v240
  %v1093 = vunpack.c.h.b16 %v240
  %v1094 = vunpack.c.l.b16 %v241
  %v1095 = vunpack.c.h.b16 %v241
  %v1096 = vunpack.c.l.b16 %v242
  %v1097 = vunpack.c.h.b16 %v242
  %v1098 = vunpack.c.l.b16 %v243
  %v1099 = vunpack.c.h.b16 %v243
  %v1100 = vunpack.c.l.b16 %v244
  %v1101 = vunpack.c.h.b16 %v244
  %v1102 = vunpack.c.l.b16 %v245
  %v1103 = vunpack.c.h.b16 %v245
  %v1104 = vunpack.c.l.b16 %v246
  %v1105 = vunpack.c.h.b16 %v246
  %v1106 = vunpack.c.l.b16 %v247
  %v1107 = vunpack.c.h.b16 %v247
  %v1108 = vunpack.c.l.b16 %v248
  %v1109 = vunpack.c.h.b16 %v248
  %v1110 = vunpack.c.l.b16 %v249
  %v1111 = vunpack.c.h.b16 %v249
  %v1112 = vunpack.c.l.b16 %v250
  %v1113 = vunpack.c.h.b16 %v250
  %v1114 = vunpack.c.l.b16 %v251
  %v1115 = vunpack.c.h.b16 %v251
  %v1116 = vunpack.c.l.b16 %v252
  %v1117 = vunpack.c.h.b16 %v252
  %v1118 = vunpack.c.l.b16 %v253
  %v1119 = vunpack.c.h.b16 %v253
  %v1120 = vunpack.c.l.b16 %v254
  %v1121 = vunpack.c.h.b16 %v254
  %v1122 = vunpack.c.l.b16 %v255
  %v1123 = vunpack.c.h.b16 %v255
  %v1124 = vunpack.c.l.b16 %v256
  %v1125 = vunpack.c.h.b16 %v256
  %v1126 = vunpack.c.l.b16 %v257
  %v1127 = vunpack.c.h.b16 %v257
  %v1128 = vunpack.c.l.b16 %v258
  %v1129 = vunpack.c.h.b16 %v258
  %v1130 = vunpack.c.l.b16 %v259
  %v1131 = vunpack.c.h.b16 %v259
  %v1132 = vunpack.c.l.b16 %v260
  %v1133 = vunpack.c.h.b16 %v260
  %v1134 = vunpack.c.l.b16 %v261
  %v1135 = vunpack.c.h.b16 %v261
  %v1136 = vunpack.c.l.b16 %v262
  %v1137 = vunpack.c.h.b16 %v262
  %v1138 = vunpack.c.l.b16 %v263
  %v1139 = vunpack.c.h.b16 %v263
  %v1140 = vunpack.c.l.b16 %v264
  %v1141 = vunpack.c.h.b16 %v264
  %v1142 = vunpack.c.l.b16 %v265
  %v1143 = vunpack.c.h.b16 %v265
  %v1144 = vunpack.c.l.b16 %v266
  %v1145 = vunpack.c.h.b16 %v266
  %v1146 = vunpack.c.l.b16 %v267
  %v1147 = vunpack.c.h.b16 %v267
  %v1148 = vunpack.c.l.b16 %v268
  %v1149 = vunpack.c.h.b16 %v268
  %v1150 = vunpack.c.l.b16 %v269
  %v1151 = vunpack.c.h.b16 %v269
  %v1152 = vunpack.c.l.b16 %v270
  %v1153 = vunpack.c.h.b16 %v270
  %v1154 = vunpack.c.l.b16 %v271
  %v1155 = vunpack.c.h.b16 %v271
  %v1156 = vunpack.c.l.b16 %v272
  %v1157 = vunpack.c.h.b16 %v272
  %v1158 = vunpack.c.l.b16 %v273
  %v1159 = vunpack.c.h.b16 %v273
  %v1160 = vunpack.c.l.b16 %v274
  %v1161 = vunpack.c.h.b16 %v274
  %v1162 = vunpack.c.l.b16 %v275
  %v1163 = vunpack.c.h.b16 %v275
  %v1164 = vunpack.c.l.b16 %v276
  %v1165 = vunpack.c.h.b16 %v276
  %v1166 = vunpack.c.l.b16 %v277
  %v1167 = vunpack.c.h.b16 %v277
  %v1168 = vunpack.c.l.b16 %v278
  %v1169 = vunpack.c.h.b16 %v278
  %v1170 = vunpack.c.l.b16 %v279
  %v1171 = vunpack.c.h.b16 %v279
  %v1172 = vunpack.c.l.b16 %v280
  %v1173 = vunpack.c.h.b16 %v280
  %v1174 = vunpack.c.l.b16 %v281
  %v1175 = vunpack.c.h.b16 %v281
  %v1176 = vunpack.c.l.b16 %v282
  %v1177 = vunpack.c.h.b16 %v282
  %v1178 = vunpack.c.l.b16 %v283
  %v1179 = vunpack.c.h.b16 %v283
  %v1180 = vunpack.c.l.b16 %v284
  %v1181 = vunpack.c.h.b16 %v284
  %v1182 = vunpack.c.l.b16 %v285
  %v1183 = vunpack.c.h.b16 %v285
  %v1184 = vunpack.c.l.b16 %v286
  %v1185 = vunpack.c.h.b16 %v286
  %v1186 = vunpack.c.l.b16 %v287
  %v1187 = vunpack.c.h.b16 %v287
  %v1188 = vunpack.c.l.b16 %v288
  %v1189 = vunpack.c.h.b16 %v288
  %v1190 = vunpack.c.l.b16 %v289
  %v1191 = vunpack.c.h.b16 %v289
  %v1192 = vunpack.c.l.b16 %v290
  %v1193 = vunpack.c.h.b16 %v290
  %v1194 = vunpack.c.l.b16 %v291
  %v1195 = vunpack.c.h.b16 %v291
  %v1196 = vunpack.c.l.b16 %v292
  %v1197 = vunpack.c.h.b16 %v292
  %v1198 = vunpack.c.l.b16 %v293
  %v1199 = vunpack.c.h.b16 %v293
  %v1200 = vunpack.c.l.b16 %v294
  %v1201 = vunpack.c.h.b16 %v294
  %v1202 = vunpack.c.l.b16 %v295
  %v1203 = vunpack.c.h.b16 %v295
  %v1204 = vunpack.c.l.b16 %v296
  %v1205 = vunpack.c.h.b16 %v296
  %v1206 = vunpack.c.l.b16 %v297
  %v1207 = vunpack.c.h.b16 %v297
  %v1208 = vunpack.c.l.b16 %v298
  %v1209 = vunpack.c.h.b16 %v298
  %v1210 = vunpack.c.l.b16 %v299
  %v1211 = vunpack.c.h.b16 %v299
  %v1212 = vunpack.c.l.b16 %v300
  %v1213 = vunpack.c.h.b16 %v300
  %v1214 = vunpack.c.l.b16 %v301
  %v1215 = vunpack.c.h.b16 %v301
  %v1216 = vunpack.c.l.b16 %v302
  %v1217 = vunpack.c.h.b16 %v302
  %v1218 = vunpack.c.l.b16 %v303
  %v1219 = vunpack.c.h.b16 %v303
  %v1220 = vunpack.c.l.b16 %v304
  %v1221 = vunpack.c.h.b16 %v304
  %v1222 = vpack.c.b16 %v652, %v646
  %v1223 = vpack.c.b16 %v653, %v647
  %v1224 = vpack.c.b16 %v654, %v648
  %v1225 = vpack.c.b16 %v655, %v649
  %v1226 = vpack.c.b16 %v656, %v650
  %v1227 = vpack.c.b16 %v657, %v651
  %v1228 = vpack.c.b16 %v664, %v658
  %v1229 = vpack.c.b16 %v665, %v659
  %v1230 = vpack.c.b16 %v666, %v660
  %v1231 = vpack.c.b16 %v667, %v661
  %v1232 = vpack.c.b16 %v668, %v662
  %v1233 = vpack.c.b16 %v669, %v663
  %v1234 = vpack.c.b16 %v676, %v670
  %v1235 = vpack.c.b16 %v677, %v671
  %v1236 = vpack.c.b16 %v678, %v672
  %v1237 = vpack.c.b16 %v679, %v673
  %v1238 = vpack.c.b16 %v680, %v674
  %v1239 = vpack.c.b16 %v681, %v675
  %v1240 = vpack.c.b16 %v688, %v682
  %v1241 = vpack.c.b16 %v689, %v683
  %v1242 = vpack.c.b16 %v690, %v684
  %v1243 = vpack.c.b16 %v691, %v685
  %v1244 = vpack.c.b16 %v692, %v686
  %v1245 = vpack.c.b16 %v693, %v687
  %v1246 = vpack.c.b16 %v700, %v694
  %v1247 = vpack.c.b16 %v701, %v695
  %v1248 = vpack.c.b16 %v702, %v696
  %v1249 = vpack.c.b16 %v703, %v697
  %v1250 = vpack.c.b16 %v704, %v698
  %v1251 = vpack.c.b16 %v705, %v699
  %v1252 = vpack.c.b16 %v712, %v706
  %v1253 = vpack.c.b16 %v713, %v707
  %v1254 = vpack.c.b16 %v714, %v708
  %v1255 = vpack.c.b16 %v715, %v709
  %v1256 = vpack.c.b16 %v716, %v710
  %v1257 = vpack.c.b16 %v717, %v711
  %v1258 = vpack.c.b16 %v724, %v718
  %v1259 = vpack.c.b16 %v725, %v719
  %v1260 = vpack.c.b16 %v726, %v720
  %v1261 = vpack.c.b16 %v727, %v721
  %v1262 = vpack.c.b16 %v728, %v722
  %v1263 = vpack.c.b16 %v729, %v723
  %v1264 = vpack.c.b16 %v736, %v730
  %v1265 = vpack.c.b16 %v737, %v731
  %v1266 = vpack.c.b16 %v738, %v732
  %v1267 = vpack.c.b16 %v739, %v733
  %v1268 = vpack.c.b16 %v740, %v734
  %v1269 = vpack.c.b16 %v741, %v735
  %v1270 = vpack.c.b16 %v748, %v742
  %v1271 = vpack.c.b16 %v749, %v743
  %v1272 = vpack.c.b16 %v750, %v744
  %v1273 = vpack.c.b16 %v751, %v745
  %v1274 = vpack.c.b16 %v752, %v746
  %v1275 = vpack.c.b16 %v753, %v747
  %v1276 = vpack.c.b16 %v760, %v754
  %v1277 = vpack.c.b16 %v761, %v755
  %v1278 = vpack.c.b16 %v762, %v756
  %v1279 = vpack.c.b16 %v763, %v757
  %v1280 = vpack.c.b16 %v764, %v758
  %v1281 = vpack.c.b16 %v765, %v759
  %v1282 = vpack.c.b16 %v772, %v766
  %v1283 = vpack.c.b16 %v773, %v767
  %v1284 = vpack.c.b16 %v774, %v768
  %v1285 = vpack.c.b16 %v775, %v769
  %v1286 = vpack.c.b16 %v776, %v770
  %v1287 = vpack.c.b16 %v777, %v771
  %v1288 = vpack.c.b16 %v784, %v778
  %v1289 = vpack.c.b16 %v785, %v779
  %v1290 = vpack.c.b16 %v786, %v780
  %v1291 = vpack.c.b16 %v787, %v781
  %v1292 = vpack.c.b16 %v788, %v782
  %v1293 = vpack.c.b16 %v789, %v783
  %v1294 = vpack.c.b16 %v796, %v790
  %v1295 = vpack.c.b16 %v797, %v791
  %v1296 = vpack.c.b16 %v798, %v792
  %v1297 = vpack.c.b16 %v799, %v793
  %v1298 = vpack.c.b16 %v800, %v794
  %v1299 = vpack.c.b16 %v801, %v795
  %v1300 = vpack.c.b16 %v808, %v802
  %v1301 = vpack.c.b16 %v809, %v803
  %v1302 = vpack.c.b16 %v810, %v804
  %v1303 = vpack.c.b16 %v811, %v805
  %v1304 = vpack.c.b16 %v812, %v806
  %v1305 = vpack.c.b16 %v813, %v807
  %v1306 = vpack.c.b16 %v820, %v814
  %v1307 = vpack.c.b16 %v821, %v815
  %v1308 = vpack.c.b16 %v822, %v816
  %v1309 = vpack.c.b16 %v823, %v817
  %v1310 = vpack.c.b16 %v824, %v818
  %v1311 = vpack.c.b16 %v825, %v819
  %v1312 = vpack.c.b16 %v832, %v826
  %v1313 = vpack.c.b16 %v833, %v827
  %v1314 = vpack.c.b16 %v834, %v828
  %v1315 = vpack.c.b16 %v835, %v829
  %v1316 = vpack.c.b16 %v836, %v830
  %v1317 = vpack.c.b16 %v837, %v831
  %v1318 = vpack.c.b16 %v844, %v838
  %v1319 = vpack.c.b16 %v845, %v839
  %v1320 = vpack.c.b16 %v846, %v840
  %v1321 = vpack.c.b16 %v847, %v841
  %v1322 = vpack.c.b16 %v848, %v842
  %v1323 = vpack.c.b16 %v849, %v843
  %v1324 = vpack.c.b16 %v856, %v850
  %v1325 = vpack.c.b16 %v857, %v851
  %v1326 = vpack.c.b16 %v858, %v852
  %v1327 = vpack.c.b16 %v859, %v853
  %v1328 = vpack.c.b16 %v860, %v854
  %v1329 = vpack.c.b16 %v861, %v855
  %v1330 = vpack.c.b16 %v868, %v862
  %v1331 = vpack.c.b16 %v869, %v863
  %v1332 = vpack.c.b16 %v870, %v864
  %v1333 = vpack.c.b16 %v871, %v865
  %v1334 = vpack.c.b16 %v872, %v866
  %v1335 = vpack.c.b16 %v873, %v867
  %v1336 = vpack.c.b16 %v880, %v874
  %v1337 = vpack.c.b16 %v881, %v875
  %v1338 = vpack.c.b16 %v882, %v876
  %v1339 = vpack.c.b16 %v883, %v877
  %v1340 = vpack.c.b16 %v884, %v878
  %v1341 = vpack.c.b16 %v885, %v879
  %v1342 = vpack.c.b16 %v892, %v886
  %v1343 = vpack.c.b16 %v893, %v887
  %v1344 = vpack.c.b16 %v894, %v888
  %v1345 = vpack.c.b16 %v895, %v889
  %v1346 = vpack.c.b16 %v896, %v890
  %v1347 = vpack.c.b16 %v897, %v891
  %v1348 = vpack.c.b16 %v904, %v898
  %v1349 = vpack.c.b16 %v905, %v899
  %v1350 = vpack.c.b16 %v906, %v900
  %v1351 = vpack.c.b16 %v907, %v901
  %v1352 = vpack.c.b16 %v908, %v902
  %v1353 = vpack.c.b16 %v909, %v903
  %v1354 = vpack.c.b16 %v916, %v910
  %v1355 = vpack.c.b16 %v917, %v911
  %v1356 = vpack.c.b16 %v918, %v912
  %v1357 = vpack.c.b16 %v919, %v913
  %v1358 = vpack.c.b16 %v920, %v914
  %v1359 = vpack.c.b16 %v921, %v915
  %v1360 = vpack.c.b16 %v928, %v922
  %v1361 = vpack.c.b16 %v929, %v923
  %v1362 = vpack.c.b16 %v930, %v924
  %v1363 = vpack.c.b16 %v931, %v925
  %v1364 = vpack.c.b16 %v932, %v926
  %v1365 = vpack.c.b16 %v933, %v927
  %v1366 = vpack.c.b16 %v940, %v934
  %v1367 = vpack.c.b16 %v941, %v935
  %v1368 = vpack.c.b16 %v942, %v936
  %v1369 = vpack.c.b16 %v943, %v937
  %v1370 = vpack.c.b16 %v944, %v938
  %v1371 = vpack.c.b16 %v945, %v939
  %v1372 = vpack.c.b16 %v952, %v946
  %v1373 = vpack.c.b16 %v953, %v947
  %v1374 = vpack.c.b16 %v954, %v948
  %v1375 = vpack.c.b16 %v955, %v949
  %v1376 = vpack.c.b16 %v956, %v950
  %v1377 = vpack.c.b16 %v957, %v951
  %v1378 = vpack.c.b16 %v964, %v958
  %v1379 = vpack.c.b16 %v965, %v959
  %v1380 = vpack.c.b16 %v966, %v960
  %v1381 = vpack.c.b16 %v967, %v961
  %v1382 = vpack.c.b16 %v968, %v962
  %v1383 = vpack.c.b16 %v969, %v963
  %v1384 = vpack.c.b16 %v976, %v970
  %v1385 = vpack.c.b16 %v977, %v971
  %v1386 = vpack.c.b16 %v978, %v972
  %v1387 = vpack.c.b16 %v979, %v973
  %v1388 = vpack.c.b16 %v980, %v974
  %v1389 = vpack.c.b16 %v981, %v975
  %v1390 = vpack.c.b16 %v988, %v982
  %v1391 = vpack.c.b16 %v989, %v983
  %v1392 = vpack.c.b16 %v990, %v984
  %v1393 = vpack.c.b16 %v991, %v985
  %v1394 = vpack.c.b16 %v992, %v986
  %v1395 = vpack.c.b16 %v993, %v987
  %v1396 = vpack.c.b16 %v1000, %v994
  %v1397 = vpack.c.b16 %v1001, %v995
  %v1398 = vpack.c.b16 %v1002, %v996
  %v1399 = vpack.c.b16 %v1003, %v997
  %v1400 = vpack.c.b16 %v1004, %v998
  %v1401 = vpack.c.b16 %v1005, %v999
  %v1402 = vpack.c.b16 %v1012, %v1006
  %v1403 = vpack.c.b16 %v1013, %v1007
  %v1404 = vpack.c.b16 %v1014, %v1008
  %v1405 = vpack.c.b16 %v1015, %v1009
  %v1406 = vpack.c.b16 %v1016, %v1010
  %v1407 = vpack.c.b16 %v1017, %v1011
  %v1408 = vpack.c.b16 %v1024, %v1018
  %v1409 = vpack.c.b16 %v1025, %v1019
  %v1410 = vpack.c.b16 %v1026, %v1020
  %v1411 = vpack.c.b16 %v1027, %v1021
  %v1412 = vpack.c.b16 %v1028, %v1022
  %v1413 = vpack.c.b16 %v1029, %v1023
  %v1414 = vpack.c.b16 %v1036, %v1030
  %v1415 = vpack.c.b16 %v1037, %v1031
  %v1416 = vpack.c.b16 %v1038, %v1032
  %v1417 = vpack.c.b16 %v1039, %v1033
  %v1418 = vpack.c.b16 %v1040, %v1034
  %v1419 = vpack.c.b16 %v1041, %v1035
  %v1420 = vpack.c.b16 %v1048, %v1042
  %v1421 = vpack.c.b16 %v1049, %v1043
  %v1422 = vpack.c.b16 %v1050, %v1044
  %v1423 = vpack.c.b16 %v1051, %v1045
  %v1424 = vpack.c.b16 %v1052, %v1046
  %v1425 = vpack.c.b16 %v1053, %v1047
  %v1426 = vpack.c.b16 %v1060, %v1054
  %v1427 = vpack.c.b16 %v1061, %v1055
  %v1428 = vpack.c.b16 %v1062, %v1056
  %v1429 = vpack.c.b16 %v1063, %v1057
  %v1430 = vpack.c.b16 %v1064, %v1058
  %v1431 = vpack.c.b16 %v1065, %v1059
  %v1432 = vpack.c.b16 %v1072, %v1066
  %v1433 = vpack.c.b16 %v1073, %v1067
  %v1434 = vpack.c.b16 %v1074, %v1068
  %v1435 = vpack.c.b16 %v1075, %v1069
  %v1436 = vpack.c.b16 %v1076, %v1070
  %v1437 = vpack.c.b16 %v1077, %v1071
  %v1438 = vpack.c.b16 %v1084, %v1078
  %v1439 = vpack.c.b16 %v1085, %v1079
  %v1440 = vpack.c.b16 %v1086, %v1080
  %v1441 = vpack.c.b16 %v1087, %v1081
  %v1442 = vpack.c.b16 %v1088, %v1082
  %v1443 = vpack.c.b16 %v1089, %v1083
  %v1444 = vpack.c.b16 %v1096, %v1090
  %v1445 = vpack.c.b16 %v1097, %v1091
  %v1446 = vpack.c.b16 %v1098, %v1092
  %v1447 = vpack.c.b16 %v1099, %v1093
  %v1448 = vpack.c.b16 %v1100, %v1094
  %v1449 = vpack.c.b16 %v1101, %v1095
  %v1450 = vpack.c.b16 %v1108, %v1102
  %v1451 = vpack.c.b16 %v1109, %v1103
  %v1452 = vpack.c.b16 %v1110, %v1104
  %v1453 = vpack.c.b16 %v1111, %v1105
  %v1454 = vpack.c.b16 %v1112, %v1106
  %v1455 = vpack.c.b16 %v1113, %v1107
  %v1456 = vpack.c.b16 %v1120, %v1114
  %v1457 = vpack.c.b16 %v1121, %v1115
  %v1458 = vpack.c.b16 %v1122, %v1116
  %v1459 = vpack.c.b16 %v1123, %v1117
  %v1460 = vpack.c.b16 %v1124, %v1118
  %v1461 = vpack.c.b16 %v1125, %v1119
  %v1462 = vpack.c.b16 %v1132, %v1126
  %v1463 = vpack.c.b16 %v1133, %v1127
  %v1464 = vpack.c.b16 %v1134, %v1128
  %v1465 = vpack.c.b16 %v1135, %v1129
  %v1466 = vpack.c.b16 %v1136, %v1130
  %v1467 = vpack.c.b16 %v1137, %v1131
  %v1468 = vpack.c.b16 %v1144, %v1138
  %v1469 = vpack.c.b16 %v1145, %v1139
  %v1470 = vpack.c.b16 %v1146, %v1140
  %v1471 = vpack.c.b16 %v1147, %v1141
  %v1472 = vpack.c.b16 %v1148, %v1142
  %v1473 = vpack.c.b16 %v1149, %v1143
  %v1474 = vpack.c.b16 %v1156, %v1150
  %v1475 = vpack.c.b16 %v1157, %v1151
  %v1476 = vpack.c.b16 %v1158, %v1152
  %v1477 = vpack.c.b16 %v1159, %v1153
  %v1478 = vpack.c.b16 %v1160, %v1154
  %v1479 = vpack.c.b16 %v1161, %v1155
  %v1480 = vpack.c.b16 %v1168, %v1162
  %v1481 = vpack.c.b16 %v1169, %v1163
  %v1482 = vpack.c.b16 %v1170, %v1164
  %v1483 = vpack.c.b16 %v1171, %v1165
  %v1484 = vpack.c.b16 %v1172, %v1166
  %v1485 = vpack.c.b16 %v1173, %v1167
  %v1486 = vpack.c.b16 %v1180, %v1174
  %v1487 = vpack.c.b16 %v1181, %v1175
  %v1488 = vpack.c.b16 %v1182, %v1176
  %v1489 = vpack.c.b16 %v1183, %v1177
  %v1490 = vpack.c.b16 %v1184, %v1178
  %v1491 = vpack.c.b16 %v1185, %v1179
  %v1492 = vpack.c.b16 %v1192, %v1186
  %v1493 = vpack.c.b16 %v1193, %v1187
  %v1494 = vpack.c.b16 %v1194, %v1188
  %v1495 = vpack.c.b16 %v1195, %v1189
  %v1496 = vpack.c.b16 %v1196, %v1190
  %v1497 = vpack.c.b16 %v1197, %v1191
  %v1498 = vpack.c.b16 %v1204, %v1198
  %v1499 = vpack.c.b16 %v1205, %v1199
  %v1500 = vpack.c.b16 %v1206, %v1200
  %v1501 = vpack.c.b16 %v1207, %v1201
  %v1502 = vpack.c.b16 %v1208, %v1202
  %v1503 = vpack.c.b16 %v1209, %v1203
  %v1504 = vpack.c.b16 %v1216, %v1210
  %v1505 = vpack.c.b16 %v1217, %v1211
  %v1506 = vpack.c.b16 %v1218, %v1212
  %v1507 = vpack.c.b16 %v1219, %v1213
  %v1508 = vpack.c.b16 %v1220, %v1214
  %v1509 = vpack.c.b16 %v1221, %v1215
  %1798 = vmatprep.subr.bf16.mxu0 %v1223
  %1799 = vmatpush1.bf16.msra.mxu0 %v1222
  %1800 = vmatprep.subr.bf16.mxu0 %v1229
  %1801 = vmatpush1.bf16.msra.mxu0 %v1228
  %1802 = vmatprep.subr.bf16.mxu0 %v1235
  %1803 = vmatpush1.bf16.msra.mxu0 %v1234
  %1804 = vmatprep.subr.bf16.mxu0 %v1241
  %1805 = vmatpush1.bf16.msra.mxu0 %v1240
  %1806 = vmatprep.subr.bf16.mxu0 %v1247
  %1807 = vmatpush1.bf16.msra.mxu0 %v1246
  %1808 = vmatprep.subr.bf16.mxu0 %v1253
  %1809 = vmatpush1.bf16.msra.mxu0 %v1252
  %1810 = vmatprep.subr.bf16.mxu0 %v1259
  %1811 = vmatpush1.bf16.msra.mxu0 %v1258
  %1812 = vmatprep.subr.bf16.mxu0 %v1265
  %1813 = vmatpush1.bf16.msra.mxu0 %v1264
  %1814 = vmatprep.subr.bf16.mxu0 %v1271
  %1815 = vmatpush1.bf16.msra.mxu0 %v1270
  %1816 = vmatprep.subr.bf16.mxu0 %v1277
  %1817 = vmatpush1.bf16.msra.mxu0 %v1276
  %1818 = vmatprep.subr.bf16.mxu0 %v1283
  %1819 = vmatpush1.bf16.msra.mxu0 %v1282
  %1820 = vmatprep.subr.bf16.mxu0 %v1289
  %1821 = vmatpush1.bf16.msra.mxu0 %v1288
  %1822 = vmatprep.subr.bf16.mxu0 %v1295
  %1823 = vmatpush1.bf16.msra.mxu0 %v1294
  %1824 = vmatprep.subr.bf16.mxu0 %v1301
  %1825 = vmatpush1.bf16.msra.mxu0 %v1300
  %1826 = vmatprep.subr.bf16.mxu0 %v1307
  %1827 = vmatpush1.bf16.msra.mxu0 %v1306
  %1828 = vmatprep.subr.bf16.mxu0 %v1313
  %1829 = vmatpush1.bf16.msra.mxu0 %v1312
  %1830 = vmatprep.mubr.bf16.mxu0 %v347
  %1831 = vmatmul.mubr.bf16.gmra.mrb[0].mxu0 %v346
  %v1832 = vpop.f32.mrb[0].mxu0
  %v1833 = vadd.f32 %v310, %v1832
  %v1834 = vpop.f32.mrb[0].mxu0
  %v1835 = vadd.f32 %v314, %v1834
  %v1836 = vpop.f32.mrb[0].mxu0
  %v1837 = vpop.f32.mrb[0].mxu0
  %1838 = vdwg.mxu0
  %1839 = vmatprep.subr.bf16.mxu0 %v1319
  %1840 = vmatpush1.bf16.msra.mxu0 %v1318
  %1841 = vmatprep.subr.bf16.mxu0 %v1325
  %1842 = vmatpush1.bf16.msra.mxu0 %v1324
  %1843 = vmatprep.subr.bf16.mxu0 %v1331
  %1844 = vmatpush1.bf16.msra.mxu0 %v1330
  %1845 = vmatprep.subr.bf16.mxu0 %v1337
  %1846 = vmatpush1.bf16.msra.mxu0 %v1336
  %1847 = vmatprep.subr.bf16.mxu0 %v1343
  %1848 = vmatpush1.bf16.msra.mxu0 %v1342
  %1849 = vmatprep.subr.bf16.mxu0 %v1349
  %1850 = vmatpush1.bf16.msra.mxu0 %v1348
  %1851 = vmatprep.subr.bf16.mxu0 %v1355
  %1852 = vmatpush1.bf16.msra.mxu0 %v1354
  %1853 = vmatprep.subr.bf16.mxu0 %v1361
  %1854 = vmatpush1.bf16.msra.mxu0 %v1360
  %1855 = vmatprep.subr.bf16.mxu0 %v1367
  %1856 = vmatpush1.bf16.msra.mxu0 %v1366
  %1857 = vmatprep.subr.bf16.mxu0 %v1373
  %1858 = vmatpush1.bf16.msra.mxu0 %v1372
  %1859 = vmatprep.subr.bf16.mxu0 %v1379
  %1860 = vmatpush1.bf16.msra.mxu0 %v1378
  %1861 = vmatprep.subr.bf16.mxu0 %v1385
  %1862 = vmatpush1.bf16.msra.mxu0 %v1384
  %1863 = vmatprep.subr.bf16.mxu0 %v1391
  %1864 = vmatpush1.bf16.msra.mxu0 %v1390
  %1865 = vmatprep.subr.bf16.mxu0 %v1397
  %1866 = vmatpush1.bf16.msra.mxu0 %v1396
  %1867 = vmatprep.subr.bf16.mxu0 %v1403
  %1868 = vmatpush1.bf16.msra.mxu0 %v1402
  %1869 = vmatprep.subr.bf16.mxu0 %v1409
  %1870 = vmatpush1.bf16.msra.mxu0 %v1408
  %1871 = vmatprep.mubr.bf16.mxu0 %v349
  %1872 = vmatmul.mubr.bf16.gmra.mrb[0].mxu0 %v348
  %v1873 = vpop.f32.mrb[0].mxu0
  %v1874 = vadd.f32 %v1833, %v1873
  %v1875 = vpop.f32.mrb[0].mxu0
  %v1876 = vadd.f32 %v1835, %v1875
  %v1877 = vpop.f32.mrb[0].mxu0
  %v1878 = vpop.f32.mrb[0].mxu0
  %1879 = vdwg.mxu0
  %1880 = vmatprep.subr.bf16.mxu0 %v1415
  %1881 = vmatpush1.bf16.msra.mxu0 %v1414
  %1882 = vmatprep.subr.bf16.mxu0 %v1421
  %1883 = vmatpush1.bf16.msra.mxu0 %v1420
  %1884 = vmatprep.subr.bf16.mxu0 %v1427
  %1885 = vmatpush1.bf16.msra.mxu0 %v1426
  %1886 = vmatprep.subr.bf16.mxu0 %v1433
  %1887 = vmatpush1.bf16.msra.mxu0 %v1432
  %1888 = vmatprep.subr.bf16.mxu0 %v1439
  %1889 = vmatpush1.bf16.msra.mxu0 %v1438
  %1890 = vmatprep.subr.bf16.mxu0 %v1445
  %1891 = vmatpush1.bf16.msra.mxu0 %v1444
  %1892 = vmatprep.subr.bf16.mxu0 %v1451
  %1893 = vmatpush1.bf16.msra.mxu0 %v1450
  %1894 = vmatprep.subr.bf16.mxu0 %v1457
  %1895 = vmatpush1.bf16.msra.mxu0 %v1456
  %1896 = vmatprep.subr.bf16.mxu0 %v1463
  %1897 = vmatpush1.bf16.msra.mxu0 %v1462
  %1898 = vmatprep.subr.bf16.mxu0 %v1469
  %1899 = vmatpush1.bf16.msra.mxu0 %v1468
  %1900 = vmatprep.subr.bf16.mxu0 %v1475
  %1901 = vmatpush1.bf16.msra.mxu0 %v1474
  %1902 = vmatprep.subr.bf16.mxu0 %v1481
  %1903 = vmatpush1.bf16.msra.mxu0 %v1480
  %1904 = vmatprep.subr.bf16.mxu0 %v1487
  %1905 = vmatpush1.bf16.msra.mxu0 %v1486
  %1906 = vmatprep.subr.bf16.mxu0 %v1493
  %1907 = vmatpush1.bf16.msra.mxu0 %v1492
  %1908 = vmatprep.subr.bf16.mxu0 %v1499
  %1909 = vmatpush1.bf16.msra.mxu0 %v1498
  %1910 = vmatprep.subr.bf16.mxu0 %v1505
  %1911 = vmatpush1.bf16.msra.mxu0 %v1504
  %1912 = vmatprep.mubr.bf16.mxu0 %v351
  %1913 = vmatmul.mubr.bf16.gmra.mrb[0].mxu0 %v350
  %v1914 = vpop.f32.mrb[0].mxu0
  %v1915 = vadd.f32 %v1874, %v1914
  %v1916 = vpop.f32.mrb[0].mxu0
  %v1917 = vadd.f32 %v1876, %v1916
  %v1918 = vpop.f32.mrb[0].mxu0
  %v1919 = vpop.f32.mrb[0].mxu0
  %1920 = vdwg.mxu0
  %1921 = vmatprep.subr.bf16.mxu0 %v1225
  %1922 = vmatpush1.bf16.msra.mxu0 %v1224
  %1923 = vmatprep.subr.bf16.mxu0 %v1231
  %1924 = vmatpush1.bf16.msra.mxu0 %v1230
  %1925 = vmatprep.subr.bf16.mxu0 %v1237
  %1926 = vmatpush1.bf16.msra.mxu0 %v1236
  %1927 = vmatprep.subr.bf16.mxu0 %v1243
  %1928 = vmatpush1.bf16.msra.mxu0 %v1242
  %1929 = vmatprep.subr.bf16.mxu0 %v1249
  %1930 = vmatpush1.bf16.msra.mxu0 %v1248
  %1931 = vmatprep.subr.bf16.mxu0 %v1255
  %1932 = vmatpush1.bf16.msra.mxu0 %v1254
  %1933 = vmatprep.subr.bf16.mxu0 %v1261
  %1934 = vmatpush1.bf16.msra.mxu0 %v1260
  %1935 = vmatprep.subr.bf16.mxu0 %v1267
  %1936 = vmatpush1.bf16.msra.mxu0 %v1266
  %1937 = vmatprep.subr.bf16.mxu0 %v1273
  %1938 = vmatpush1.bf16.msra.mxu0 %v1272
  %1939 = vmatprep.subr.bf16.mxu0 %v1279
  %1940 = vmatpush1.bf16.msra.mxu0 %v1278
  %1941 = vmatprep.subr.bf16.mxu0 %v1285
  %1942 = vmatpush1.bf16.msra.mxu0 %v1284
  %1943 = vmatprep.subr.bf16.mxu0 %v1291
  %1944 = vmatpush1.bf16.msra.mxu0 %v1290
  %1945 = vmatprep.subr.bf16.mxu0 %v1297
  %1946 = vmatpush1.bf16.msra.mxu0 %v1296
  %1947 = vmatprep.subr.bf16.mxu0 %v1303
  %1948 = vmatpush1.bf16.msra.mxu0 %v1302
  %1949 = vmatprep.subr.bf16.mxu0 %v1309
  %1950 = vmatpush1.bf16.msra.mxu0 %v1308
  %1951 = vmatprep.subr.bf16.mxu0 %v1315
  %1952 = vmatpush1.bf16.msra.mxu0 %v1314
  %1953 = vmatprep.mubr.bf16.mxu0 %v347
  %1954 = vmatmul.mubr.bf16.gmra.mrb[0].mxu0 %v346
  %v1955 = vpop.f32.mrb[0].mxu0
  %v1956 = vadd.f32 %v318, %v1955
  %v1957 = vpop.f32.mrb[0].mxu0
  %v1958 = vadd.f32 %v322, %v1957
  %v1959 = vpop.f32.mrb[0].mxu0
  %v1960 = vpop.f32.mrb[0].mxu0
  %1961 = vdwg.mxu0
  %1962 = vmatprep.subr.bf16.mxu0 %v1321
  %1963 = vmatpush1.bf16.msra.mxu0 %v1320
  %1964 = vmatprep.subr.bf16.mxu0 %v1327
  %1965 = vmatpush1.bf16.msra.mxu0 %v1326
  %1966 = vmatprep.subr.bf16.mxu0 %v1333
  %1967 = vmatpush1.bf16.msra.mxu0 %v1332
  %1968 = vmatprep.subr.bf16.mxu0 %v1339
  %1969 = vmatpush1.bf16.msra.mxu0 %v1338
  %1970 = vmatprep.subr.bf16.mxu0 %v1345
  %1971 = vmatpush1.bf16.msra.mxu0 %v1344
  %1972 = vmatprep.subr.bf16.mxu0 %v1351
  %1973 = vmatpush1.bf16.msra.mxu0 %v1350
  %1974 = vmatprep.subr.bf16.mxu0 %v1357
  %1975 = vmatpush1.bf16.msra.mxu0 %v1356
  %1976 = vmatprep.subr.bf16.mxu0 %v1363
  %1977 = vmatpush1.bf16.msra.mxu0 %v1362
  %1978 = vmatprep.subr.bf16.mxu0 %v1369
  %1979 = vmatpush1.bf16.msra.mxu0 %v1368
  %1980 = vmatprep.subr.bf16.mxu0 %v1375
  %1981 = vmatpush1.bf16.msra.mxu0 %v1374
  %1982 = vmatprep.subr.bf16.mxu0 %v1381
  %1983 = vmatpush1.bf16.msra.mxu0 %v1380
  %1984 = vmatprep.subr.bf16.mxu0 %v1387
  %1985 = vmatpush1.bf16.msra.mxu0 %v1386
  %1986 = vmatprep.subr.bf16.mxu0 %v1393
  %1987 = vmatpush1.bf16.msra.mxu0 %v1392
  %1988 = vmatprep.subr.bf16.mxu0 %v1399
  %1989 = vmatpush1.bf16.msra.mxu0 %v1398
  %1990 = vmatprep.subr.bf16.mxu0 %v1405
  %1991 = vmatpush1.bf16.msra.mxu0 %v1404
  %1992 = vmatprep.subr.bf16.mxu0 %v1411
  %1993 = vmatpush1.bf16.msra.mxu0 %v1410
  %1994 = vmatprep.mubr.bf16.mxu0 %v349
  %1995 = vmatmul.mubr.bf16.gmra.mrb[0].mxu0 %v348
  %v1996 = vpop.f32.mrb[0].mxu0
  %v1997 = vadd.f32 %v1956, %v1996
  %v1998 = vpop.f32.mrb[0].mxu0
  %v1999 = vadd.f32 %v1958, %v1998
  %v2000 = vpop.f32.mrb[0].mxu0
  %v2001 = vpop.f32.mrb[0].mxu0
  %2002 = vdwg.mxu0
  %2003 = vmatprep.subr.bf16.mxu0 %v1417
  %2004 = vmatpush1.bf16.msra.mxu0 %v1416
  %2005 = vmatprep.subr.bf16.mxu0 %v1423
  %2006 = vmatpush1.bf16.msra.mxu0 %v1422
  %2007 = vmatprep.subr.bf16.mxu0 %v1429
  %2008 = vmatpush1.bf16.msra.mxu0 %v1428
  %2009 = vmatprep.subr.bf16.mxu0 %v1435
  %2010 = vmatpush1.bf16.msra.mxu0 %v1434
  %2011 = vmatprep.subr.bf16.mxu0 %v1441
  %2012 = vmatpush1.bf16.msra.mxu0 %v1440
  %2013 = vmatprep.subr.bf16.mxu0 %v1447
  %2014 = vmatpush1.bf16.msra.mxu0 %v1446
  %2015 = vmatprep.subr.bf16.mxu0 %v1453
  %2016 = vmatpush1.bf16.msra.mxu0 %v1452
  %2017 = vmatprep.subr.bf16.mxu0 %v1459
  %2018 = vmatpush1.bf16.msra.mxu0 %v1458
  %2019 = vmatprep.subr.bf16.mxu0 %v1465
  %2020 = vmatpush1.bf16.msra.mxu0 %v1464
  %2021 = vmatprep.subr.bf16.mxu0 %v1471
  %2022 = vmatpush1.bf16.msra.mxu0 %v1470
  %2023 = vmatprep.subr.bf16.mxu0 %v1477
  %2024 = vmatpush1.bf16.msra.mxu0 %v1476
  %2025 = vmatprep.subr.bf16.mxu0 %v1483
  %2026 = vmatpush1.bf16.msra.mxu0 %v1482
  %2027 = vmatprep.subr.bf16.mxu0 %v1489
  %2028 = vmatpush1.bf16.msra.mxu0 %v1488
  %2029 = vmatprep.subr.bf16.mxu0 %v1495
  %2030 = vmatpush1.bf16.msra.mxu0 %v1494
  %2031 = vmatprep.subr.bf16.mxu0 %v1501
  %2032 = vmatpush1.bf16.msra.mxu0 %v1500
  %2033 = vmatprep.subr.bf16.mxu0 %v1507
  %2034 = vmatpush1.bf16.msra.mxu0 %v1506
  %2035 = vmatprep.mubr.bf16.mxu0 %v351
  %2036 = vmatmul.mubr.bf16.gmra.mrb[0].mxu0 %v350
  %v2037 = vpop.f32.mrb[0].mxu0
  %v2038 = vadd.f32 %v1997, %v2037
  %v2039 = vpop.f32.mrb[0].mxu0
  %v2040 = vadd.f32 %v1999, %v2039
  %v2041 = vpop.f32.mrb[0].mxu0
  %v2042 = vpop.f32.mrb[0].mxu0
  %2043 = vdwg.mxu0
  %2044 = vmatprep.subr.bf16.mxu0 %v1227
  %2045 = vmatpush1.bf16.msra.mxu0 %v1226
  %2046 = vmatprep.subr.bf16.mxu0 %v1233
  %2047 = vmatpush1.bf16.msra.mxu0 %v1232
  %2048 = vmatprep.subr.bf16.mxu0 %v1239
  %2049 = vmatpush1.bf16.msra.mxu0 %v1238
  %2050 = vmatprep.subr.bf16.mxu0 %v1245
  %2051 = vmatpush1.bf16.msra.mxu0 %v1244
  %2052 = vmatprep.subr.bf16.mxu0 %v1251
  %2053 = vmatpush1.bf16.msra.mxu0 %v1250
  %2054 = vmatprep.subr.bf16.mxu0 %v1257
  %2055 = vmatpush1.bf16.msra.mxu0 %v1256
  %2056 = vmatprep.subr.bf16.mxu0 %v1263
  %2057 = vmatpush1.bf16.msra.mxu0 %v1262
  %2058 = vmatprep.subr.bf16.mxu0 %v1269
  %2059 = vmatpush1.bf16.msra.mxu0 %v1268
  %2060 = vmatprep.subr.bf16.mxu0 %v1275
  %2061 = vmatpush1.bf16.msra.mxu0 %v1274
  %2062 = vmatprep.subr.bf16.mxu0 %v1281
  %2063 = vmatpush1.bf16.msra.mxu0 %v1280
  %2064 = vmatprep.subr.bf16.mxu0 %v1287
  %2065 = vmatpush1.bf16.msra.mxu0 %v1286
  %2066 = vmatprep.subr.bf16.mxu0 %v1293
  %2067 = vmatpush1.bf16.msra.mxu0 %v1292
  %2068 = vmatprep.subr.bf16.mxu0 %v1299
  %2069 = vmatpush1.bf16.msra.mxu0 %v1298
  %2070 = vmatprep.subr.bf16.mxu0 %v1305
  %2071 = vmatpush1.bf16.msra.mxu0 %v1304
  %2072 = vmatprep.subr.bf16.mxu0 %v1311
  %2073 = vmatpush1.bf16.msra.mxu0 %v1310
  %2074 = vmatprep.subr.bf16.mxu0 %v1317
  %2075 = vmatpush1.bf16.msra.mxu0 %v1316
  %2076 = vmatprep.mubr.bf16.mxu0 %v347
  %2077 = vmatmul.mubr.bf16.gmra.mrb[0].mxu0 %v346
  %v2078 = vpop.f32.mrb[0].mxu0
  %v2079 = vadd.f32 %v326, %v2078
  %v2080 = vpop.f32.mrb[0].mxu0
  %v2081 = vadd.f32 %v330, %v2080
  %v2082 = vpop.f32.mrb[0].mxu0
  %v2083 = vpop.f32.mrb[0].mxu0
  %2084 = vdwg.mxu0
  %2085 = vmatprep.subr.bf16.mxu0 %v1323
  %2086 = vmatpush1.bf16.msra.mxu0 %v1322
  %2087 = vmatprep.subr.bf16.mxu0 %v1329
  %2088 = vmatpush1.bf16.msra.mxu0 %v1328
  %2089 = vmatprep.subr.bf16.mxu0 %v1335
  %2090 = vmatpush1.bf16.msra.mxu0 %v1334
  %2091 = vmatprep.subr.bf16.mxu0 %v1341
  %2092 = vmatpush1.bf16.msra.mxu0 %v1340
  %2093 = vmatprep.subr.bf16.mxu0 %v1347
  %2094 = vmatpush1.bf16.msra.mxu0 %v1346
  %2095 = vmatprep.subr.bf16.mxu0 %v1353
  %2096 = vmatpush1.bf16.msra.mxu0 %v1352
  %2097 = vmatprep.subr.bf16.mxu0 %v1359
  %2098 = vmatpush1.bf16.msra.mxu0 %v1358
  %2099 = vmatprep.subr.bf16.mxu0 %v1365
  %2100 = vmatpush1.bf16.msra.mxu0 %v1364
  %2101 = vmatprep.subr.bf16.mxu0 %v1371
  %2102 = vmatpush1.bf16.msra.mxu0 %v1370
  %2103 = vmatprep.subr.bf16.mxu0 %v1377
  %2104 = vmatpush1.bf16.msra.mxu0 %v1376
  %2105 = vmatprep.subr.bf16.mxu0 %v1383
  %2106 = vmatpush1.bf16.msra.mxu0 %v1382
  %2107 = vmatprep.subr.bf16.mxu0 %v1389
  %2108 = vmatpush1.bf16.msra.mxu0 %v1388
  %2109 = vmatprep.subr.bf16.mxu0 %v1395
  %2110 = vmatpush1.bf16.msra.mxu0 %v1394
  %2111 = vmatprep.subr.bf16.mxu0 %v1401
  %2112 = vmatpush1.bf16.msra.mxu0 %v1400
  %2113 = vmatprep.subr.bf16.mxu0 %v1407
  %2114 = vmatpush1.bf16.msra.mxu0 %v1406
  %2115 = vmatprep.subr.bf16.mxu0 %v1413
  %2116 = vmatpush1.bf16.msra.mxu0 %v1412
  %2117 = vmatprep.mubr.bf16.mxu0 %v349
  %2118 = vmatmul.mubr.bf16.gmra.mrb[0].mxu0 %v348
  %v2119 = vpop.f32.mrb[0].mxu0
  %v2120 = vadd.f32 %v2079, %v2119
  %v2121 = vpop.f32.mrb[0].mxu0
  %v2122 = vadd.f32 %v2081, %v2121
  %v2123 = vpop.f32.mrb[0].mxu0
  %v2124 = vpop.f32.mrb[0].mxu0
  %2125 = vdwg.mxu0
  %2126 = vmatprep.subr.bf16.mxu0 %v1419
  %2127 = vmatpush1.bf16.msra.mxu0 %v1418
  %2128 = vmatprep.subr.bf16.mxu0 %v1425
  %2129 = vmatpush1.bf16.msra.mxu0 %v1424
  %2130 = vmatprep.subr.bf16.mxu0 %v1431
  %2131 = vmatpush1.bf16.msra.mxu0 %v1430
  %2132 = vmatprep.subr.bf16.mxu0 %v1437
  %2133 = vmatpush1.bf16.msra.mxu0 %v1436
  %2134 = vmatprep.subr.bf16.mxu0 %v1443
  %2135 = vmatpush1.bf16.msra.mxu0 %v1442
  %2136 = vmatprep.subr.bf16.mxu0 %v1449
  %2137 = vmatpush1.bf16.msra.mxu0 %v1448
  %2138 = vmatprep.subr.bf16.mxu0 %v1455
  %2139 = vmatpush1.bf16.msra.mxu0 %v1454
  %2140 = vmatprep.subr.bf16.mxu0 %v1461
  %2141 = vmatpush1.bf16.msra.mxu0 %v1460
  %2142 = vmatprep.subr.bf16.mxu0 %v1467
  %2143 = vmatpush1.bf16.msra.mxu0 %v1466
  %2144 = vmatprep.subr.bf16.mxu0 %v1473
  %2145 = vmatpush1.bf16.msra.mxu0 %v1472
  %2146 = vmatprep.subr.bf16.mxu0 %v1479
  %2147 = vmatpush1.bf16.msra.mxu0 %v1478
  %2148 = vmatprep.subr.bf16.mxu0 %v1485
  %2149 = vmatpush1.bf16.msra.mxu0 %v1484
  %2150 = vmatprep.subr.bf16.mxu0 %v1491
  %2151 = vmatpush1.bf16.msra.mxu0 %v1490
  %2152 = vmatprep.subr.bf16.mxu0 %v1497
  %2153 = vmatpush1.bf16.msra.mxu0 %v1496
  %2154 = vmatprep.subr.bf16.mxu0 %v1503
  %2155 = vmatpush1.bf16.msra.mxu0 %v1502
  %2156 = vmatprep.subr.bf16.mxu0 %v1509
  %2157 = vmatpush1.bf16.msra.mxu0 %v1508
  %2158 = vmatprep.mubr.bf16.mxu0 %v351
  %2159 = vmatmul.mubr.bf16.gmra.mrb[0].mxu0 %v350
  %v2160 = vpop.f32.mrb[0].mxu0
  %v2161 = vadd.f32 %v2120, %v2160
  %v2162 = vpop.f32.mrb[0].mxu0
  %v2163 = vadd.f32 %v2122, %v2162
  %v2164 = vpop.f32.mrb[0].mxu0
  %v2165 = vpop.f32.mrb[0].mxu0
  %2166 = vdwg.mxu0
  %v2167 = vpack.c.bf16 %v1915, %v1915
  %v2168 = vpack.c.bf16 %v1917, %v1917
  %v2169 = vpack.c.bf16 %v2038, %v2038
  %v2170 = vpack.c.bf16 %v2040, %v2040
  %v2171 = vpack.c.bf16 %v2161, %v2161
  %v2172 = vpack.c.bf16 %v2163, %v2163
  %v2179 = vunpack.c.l.b16 %v2167
  %v2180 = vunpack.c.l.b16 %v2168
  %v2181 = vunpack.c.l.b16 %v2169
  %v2182 = vunpack.c.l.b16 %v2170
  %v2183 = vunpack.c.l.b16 %v2171
  %v2184 = vunpack.c.l.b16 %v2172
  %v2185 = vpack.c.b16 %v2180, %v2179
  %v2186 = vpack.c.b16 %v2182, %v2181
  %v2187 = vpack.c.b16 %v2184, %v2183
  %2191 = vst [vmem:[%s3] sm:$0xff] %v2185
  %2192 = vst [vmem:[%s3 + $0x8] sm:$0xff] %v2186
  %2193 = vst [vmem:[%s3 + $0x10] sm:$0xff] %v2187
  // Predicated region
  $region14: #{patcher_conv_forward.1} parent=0 // pred_check
    _
  $region15: #{patcher_conv_forward.1} parent=0 // pred_check_branch
    %2195 = sbr.rel (0) target = $region17
  $region16: #{patcher_conv_forward.1} parent=0 // pred_region
    _
  $region17: #{patcher_conv_forward.1} parent=0 // pred_fallthru
    _
  // Predicated region
  $region18: #{patcher_conv_forward.1} parent=0 // pred_check
    _
  $region19: #{patcher_conv_forward.1} parent=0 // pred_check_branch
    %2197 = sbr.rel (0) target = $region21
  $region20: #{patcher_conv_forward.1} parent=0 // pred_region
    _
  $region21: #{patcher_conv_forward.1} parent=0 // pred_fallthru
    _

</llo_original>
